<compile_context>
chip_gen: v6e
topology: v6e:2x2x1
jax: 0.10.0
libtpu: 0.0.40
codegen_flags: <defaults>
</compile_context>

<pallas_src>
import jax
import jax.numpy as jnp
from jax.experimental import pallas as pl
from jax.experimental.pallas import tpu as pltpu

_CHUNK = 128  # lane width of one one-hot bag; keeps the live bag at [Vpad, 128]


def _rank_kernel(ids_q_ref, ids_d_ref, len_q_ref, len_d_ref,
                 emb_wt_ref, w1_t_ref, b1_ref, w2_ref, b2_ref, out_ref):
    # Layout (batch on the LANE axis everywhere):
    #   ids_*_ref  : [L, TILE_B]  int32   token ids
    #   len_*_ref  : [1, TILE_B]  int32
    #   emb_wt_ref : [D, Vpad]    bf16    embedding table pre-scaled by token weight
    #   w1_t_ref   : [H, 2D]      f32     fused first Linear (query rows | doc rows)
    #   b1_ref     : [H, 1], w2_ref : [H, 1], b2_ref : [1, 1]   f32
    #   out_ref    : [1, TILE_B]  f32     lane-dense scores
    vpad = emb_wt_ref.shape[1]
    tile_b = out_ref.shape[1]
    n_chunks = tile_b // _CHUNK

    # Hoisted loop-invariants (JAX does not CSE broadcast/iota inside loops).
    viota = jax.lax.broadcasted_iota(jnp.int32, (vpad, _CHUNK), 0)
    b1 = b1_ref[...]
    w2 = w2_ref[...]
    b2 = b2_ref[...]

    def count_bag(ids_ref, len_row, lo):
        # Masked token-count histogram.  Accumulate in f32 (v5e has no bf16
        # VALU); cast to bf16 only at the MXU input.
        L = ids_ref.shape[0]
        bag = jnp.zeros((vpad, _CHUNK), jnp.float32)
        for t in range(L):                                   # small static L
            tok = ids_ref[t:t + 1, lo:lo + _CHUNK]           # [1, CHUNK]
            tok = jnp.where(len_row > t, tok, -1)            # mask pad positions
            bag = bag + (viota == tok).astype(jnp.float32)   # [Vpad, CHUNK]
        return bag

    # Unrolled 128-lane chunk loop (static trip count == lax.fori_loop with
    # unroll=True); static slices -> aligned vector loads / unmasked stores.
    for c in range(n_chunks):
        lo = c * _CHUNK
        len_q = len_q_ref[:, lo:lo + _CHUNK]                 # [1, CHUNK] int32
        len_d = len_d_ref[:, lo:lo + _CHUNK]

        bag_q = count_bag(ids_q_ref, len_q, lo)              # [Vpad, CHUNK] f32
        bag_d = count_bag(ids_d_ref, len_d, lo)

        # One gather-as-matmul with the table stationary across q AND doc:
        # [D,Vpad]bf16 @ [Vpad,2*CHUNK]bf16 -> [D,2*CHUNK]f32 (counts exact in bf16).
        bags = jnp.concatenate([bag_q, bag_d], axis=1).astype(emb_wt_ref.dtype)
        gath = jnp.dot(emb_wt_ref[...], bags,
                       preferred_element_type=jnp.float32)   # [D, 2*CHUNK]

        # 1/len applied AFTER the gather, on [D, CHUNK] (Vpad/D x cheaper).
        wav_q = gath[:, :_CHUNK] * (1.0 / len_q.astype(jnp.float32))
        wav_d = gath[:, _CHUNK:] * (1.0 / len_d.astype(jnp.float32))

        # Fused Linear(2D -> H): single [H,2D]@[2D,CHUNK]; Dropout = identity (eval).
        wav = jnp.concatenate([wav_q, wav_d], axis=0)        # [2D, CHUNK]
        h = jnp.dot(w1_t_ref[...], wav,
                    preferred_element_type=jnp.float32) + b1 # [H, CHUNK]
        h = jnp.maximum(h, 0.0)                              # ReLU

        # Linear(H -> 1) as VPU multiply + sublane reduce (avoid N=1 MXU matmul).
        s = jnp.sum(h * w2, axis=0, keepdims=True) + b2      # [1, CHUNK]
        out_ref[:, lo:lo + _CHUNK] = jnp.tanh(s)


def prepare_rank_params(emb_table, tok_weight_table, w1, b1, w2, b2,
                        *, emb_dtype=jnp.bfloat16):
    """One-time parameter layout prep (hoisted out of the per-call path):
    fold w[v] into the embedding row, transpose + lane-pad the vocab axis,
    cast the table to bf16, fuse/transpose W1 to [H, 2D], column biases."""
    V, D = emb_table.shape
    H = w1.shape[1]
    vpad = ((V + _CHUNK - 1) // _CHUNK) * _CHUNK
    folded = emb_table.astype(jnp.float32) * tok_weight_table.astype(jnp.float32)
    emb_wt_t = (jnp.zeros((D, vpad), jnp.float32)
                .at[:, :V].set(folded.T).astype(emb_dtype))          # [D, Vpad]
    return dict(
        emb_wt_t=emb_wt_t,
        w1_t=w1.astype(jnp.float32).T,                               # [H, 2D]
        b1=b1.reshape(H, 1).astype(jnp.float32),
        w2=w2.reshape(H, 1).astype(jnp.float32),
        b2=b2.reshape(1, 1).astype(jnp.float32),
    )


def _pick_tile(batch, tile_b):
    """Round the batch tile to 128 lanes and keep >=2 grid steps when the batch
    allows it (so the 'parallel' axis can feed both TensorCores on v7x)."""
    tile_b = max(_CHUNK, (tile_b // _CHUNK) * _CHUNK)
    b_lanes = ((batch + _CHUNK - 1) // _CHUNK) * _CHUNK
    if b_lanes >= 2 * _CHUNK:
        tile_b = min(tile_b, max(_CHUNK, (b_lanes // 2) // _CHUNK * _CHUNK))
    else:
        tile_b = _CHUNK
    bp = ((batch + tile_b - 1) // tile_b) * tile_b
    return tile_b, bp


def _vmem_limit_bytes(params, lq, ld, tile_b):
    resident = sum(int(v.size) * v.dtype.itemsize for v in params.values())
    streamed = 2 * ((lq + ld + 2) * tile_b * 4 + tile_b * 4)  # dbl-buffered ids/lens/out
    need = resident + streamed + (8 << 20)                    # bag / spill headroom
    # Clamp to a scoped limit that is safe on every generation (v7x TC = 64 MiB).
    return int(min(max(need, 16 << 20), 48 << 20))


def rank_model_forward(params, q, doc, lengths_q, lengths_d, *, tile_b=1024):
    """RankModel forward (interaction-based, eval mode). `params` comes from
    prepare_rank_params(); only ids + lengths stream through the grid."""
    emb_wt_t = params["emb_wt_t"]
    w1_t, b1, w2, b2 = params["w1_t"], params["b1"], params["w2"], params["b2"]
    D, vpad = emb_wt_t.shape
    H = w1_t.shape[0]
    B, Lq = q.shape
    _, Ld = doc.shape

    tile_b, bp = _pick_tile(B, tile_b)

    # Streamed inputs: ids + lengths only, batch on the LANE axis.
    def pad_ids_t(ids, L):
        return jnp.zeros((bp, L), jnp.int32).at[:B].set(ids.astype(jnp.int32)).T

    ids_q_t = pad_ids_t(q, Lq)                                       # [Lq, Bp]
    ids_d_t = pad_ids_t(doc, Ld)                                     # [Ld, Bp]
    # Pad lanes get length 1 so 1/len never divides by zero on padding.
    len_q_row = jnp.ones((bp,), jnp.int32).at[:B].set(
        lengths_q.astype(jnp.int32)).reshape(1, bp)
    len_d_row = jnp.ones((bp,), jnp.int32).at[:B].set(
        lengths_d.astype(jnp.int32)).reshape(1, bp)

    stream = lambda rows: pl.BlockSpec((rows, tile_b), lambda i: (0, i))
    # Resident params: constant block index -> fetched once; single-buffered so
    # the table is not duplicated by default double-buffering (key on v7x).
    resident = lambda shape: pl.BlockSpec(shape, lambda i: (0,) * len(shape),
                                          pipeline_mode=pl.Buffered(1))

    out = pl.pallas_call(
        _rank_kernel,
        out_shape=jax.ShapeDtypeStruct((1, bp), jnp.float32),
        grid=(bp // tile_b,),
        in_specs=[
            stream(Lq),               # ids_q (transposed)
            stream(Ld),               # ids_d (transposed)
            stream(1),                # lengths_q row
            stream(1),                # lengths_d row
            resident((D, vpad)),      # weight-folded bf16 embedding table
            resident((H, 2 * D)),     # fused W1 (transposed)
            resident((H, 1)),         # b1
            resident((H, 1)),         # W2
            resident((1, 1)),         # b2
        ],
        out_specs=stream(1),          # lane-dense [1, TILE_B] scores
        compiler_params=pltpu.CompilerParams(
            dimension_semantics=("parallel",),   # batch axis -> both TCs on v7x
            vmem_limit_bytes=_vmem_limit_bytes(params, Lq, Ld, tile_b),
        ),
    )(ids_q_t, ids_d_t, len_q_row, len_d_row, emb_wt_t, w1_t, b1, w2, b2)

    return out[0, :B]                 # squeeze(1), drop batch padding


if __name__ == "__main__":
    # Small, deterministic synthetic config (matches the module's shapes).
    B = 2            # batch
    Lq, Ld = 8, 8    # query / doc sequence lengths
    D = 32           # embedding_dim
    H = 32           # hidden_sizes = [32]
    V = 50           # vocab_size

    key = jax.random.PRNGKey(0)
    k_emb, k_w, k_w1, k_b1, k_w2, k_b2, k_q, k_d = jax.random.split(key, 8)

    # Parameters (deterministic, synthetic — not a checkpoint).
    emb_table = jax.random.normal(k_emb, (V, D), jnp.float32) * 0.1
    tok_weight_table = jax.random.normal(k_w, (V, 1), jnp.float32) * 0.1 + 1.0

    # nn.Linear(2D, H) and nn.Linear(H, 1); stored as [in, out] (x @ W + b).
    w1 = jax.random.normal(k_w1, (2 * D, H), jnp.float32) * (1.0 / (2 * D) ** 0.5)
    b1 = jax.random.normal(k_b1, (1, H), jnp.float32) * 0.01
    w2 = jax.random.normal(k_w2, (H, 1), jnp.float32) * (1.0 / H ** 0.5)
    b2 = jax.random.normal(k_b2, (1, 1), jnp.float32) * 0.01

    # Inputs.
    q = jax.random.randint(k_q, (B, Lq), 0, V, jnp.int32)
    doc = jax.random.randint(k_d, (B, Ld), 0, V, jnp.int32)
    lengths_q = jnp.array([Lq, Lq - 2], jnp.int32)
    lengths_d = jnp.array([Ld - 1, Ld], jnp.int32)

    params = prepare_rank_params(emb_table, tok_weight_table, w1, b1, w2, b2)
    score = rank_model_forward(params, q, doc, lengths_q, lengths_d)
    score = jax.block_until_ready(score)

    # Pure-JAX references (pad positions t >= length masked out of the mean).
    def ref_forward(folded_table):
        mq = (jnp.arange(Lq)[None, :] < lengths_q[:, None]).astype(jnp.float32)
        md = (jnp.arange(Ld)[None, :] < lengths_d[:, None]).astype(jnp.float32)
        gq = jnp.take(folded_table, q, axis=0) * mq[:, :, None]
        gd = jnp.take(folded_table, doc, axis=0) * md[:, :, None]
        wav_q = gq.sum(1) / lengths_q.astype(jnp.float32)[:, None]
        wav_d = gd.sum(1) / lengths_d.astype(jnp.float32)[:, None]
        x = jnp.concatenate([wav_q, wav_d], 1)
        x = jnp.maximum(x @ w1 + b1, 0.0)
        return jnp.tanh(x @ w2 + b2)[:, 0]

    folded_f32 = emb_table * tok_weight_table                 # exact module math
    folded_b16 = folded_f32.astype(jnp.bfloat16).astype(jnp.float32)

    ref_exact = ref_forward(folded_f32)   # original (f32) module semantics
    ref_b16 = ref_forward(folded_b16)     # kernel's bf16-table numerics

    assert score.shape == (B,), score.shape
    # Tight check against the bf16-table reference (validates the kernel math).
    assert jnp.allclose(score, ref_b16, atol=1e-4, rtol=1e-4), (score, ref_b16)
    # Loose check against the f32 module semantics (bf16 table drift only).
    assert jnp.allclose(score, ref_exact, atol=1e-2, rtol=1e-2), (score, ref_exact)
    print("KERNEL_OK")
</pallas_src>

<mosaic_0001>
module attributes {stable_mosaic.version = 11 : i64} {
  func.func @_rank_kernel(%arg0: i32, %arg1: memref<8x128xi32, #tpu.memory_space<vmem>>, %arg2: memref<8x128xi32, #tpu.memory_space<vmem>>, %arg3: memref<1x128xi32, #tpu.memory_space<vmem>>, %arg4: memref<1x128xi32, #tpu.memory_space<vmem>>, %arg5: memref<32x128xbf16, #tpu.memory_space<vmem>>, %arg6: memref<32x64xf32, #tpu.memory_space<vmem>>, %arg7: memref<32x1xf32, #tpu.memory_space<vmem>>, %arg8: memref<32x1xf32, #tpu.memory_space<vmem>>, %arg9: memref<1x1xf32, #tpu.memory_space<vmem>>, %arg10: memref<1x128xf32, #tpu.memory_space<vmem>>) attributes {dimension_semantics = [#tpu.dimension_semantics<parallel>], iteration_bounds = array<i64: 1>, scalar_prefetch = 0 : i64, scratch_operands = 0 : i64, tpu.core_type = #tpu.core_type<tc>, window_params = [{transform_indices = @transform_0, window_bounds = array<i64: 8, 128>}, {transform_indices = @transform_1, window_bounds = array<i64: 8, 128>}, {transform_indices = @transform_2, window_bounds = array<i64: 1, 128>}, {transform_indices = @transform_3, window_bounds = array<i64: 1, 128>}, {pipeline_mode = #tpu.pipeline_mode<synchronous>, transform_indices = @transform_4, window_bounds = array<i64: 32, 128>}, {pipeline_mode = #tpu.pipeline_mode<synchronous>, transform_indices = @transform_5, window_bounds = array<i64: 32, 64>}, {pipeline_mode = #tpu.pipeline_mode<synchronous>, transform_indices = @transform_6, window_bounds = array<i64: 32, 1>}, {pipeline_mode = #tpu.pipeline_mode<synchronous>, transform_indices = @transform_7, window_bounds = array<i64: 32, 1>}, {pipeline_mode = #tpu.pipeline_mode<synchronous>, transform_indices = @transform_8, window_bounds = array<i64: 1, 1>}, {transform_indices = @transform_9, window_bounds = array<i64: 1, 128>}]} {
    %0 = tpu.iota {dimensions = array<i32: 0>} : vector<128x128xi32>
    %c0 = arith.constant 0 : index
    %c0_0 = arith.constant 0 : index
    %1 = vector.load %arg7[%c0, %c0_0] : memref<32x1xf32, #tpu.memory_space<vmem>>, vector<32x1xf32>
    %c0_1 = arith.constant 0 : index
    %c0_2 = arith.constant 0 : index
    %2 = vector.load %arg8[%c0_1, %c0_2] : memref<32x1xf32, #tpu.memory_space<vmem>>, vector<32x1xf32>
    %c0_3 = arith.constant 0 : index
    %c0_4 = arith.constant 0 : index
    %3 = vector.load %arg9[%c0_3, %c0_4] : memref<1x1xf32, #tpu.memory_space<vmem>>, vector<1x1xf32>
    %c0_5 = arith.constant 0 : index
    %c0_6 = arith.constant 0 : index
    %4 = vector.load %arg3[%c0_5, %c0_6] : memref<1x128xi32, #tpu.memory_space<vmem>>, vector<1x128xi32>
    %c0_7 = arith.constant 0 : index
    %c0_8 = arith.constant 0 : index
    %5 = vector.load %arg4[%c0_7, %c0_8] : memref<1x128xi32, #tpu.memory_space<vmem>>, vector<1x128xi32>
    %cst = arith.constant 0.000000e+00 : f32
    %6 = vector.broadcast %cst : f32 to vector<128x128xf32>
    %c0_9 = arith.constant 0 : index
    %c0_10 = arith.constant 0 : index
    %7 = vector.load %arg1[%c0_9, %c0_10] : memref<8x128xi32, #tpu.memory_space<vmem>>, vector<1x128xi32>
    %c0_i32 = arith.constant 0 : i32
    %8 = vector.broadcast %c0_i32 : i32 to vector<1x128xi32>
    %9 = arith.cmpi sgt, %4, %8 : vector<1x128xi32>
    %c-1_i32 = arith.constant -1 : i32
    %10 = vector.broadcast %c-1_i32 : i32 to vector<1x128xi32>
    %11 = arith.select %9, %7, %10 : vector<1x128xi1>, vector<1x128xi32>
    %12 = vector.broadcast %11 : vector<1x128xi32> to vector<128x128xi32>
    %13 = arith.cmpi eq, %0, %12 : vector<128x128xi32>
    %14 = arith.extui %13 : vector<128x128xi1> to vector<128x128xi32>
    %15 = arith.sitofp %14 : vector<128x128xi32> to vector<128x128xf32>
    %16 = arith.addf %6, %15 : vector<128x128xf32>
    %c1 = arith.constant 1 : index
    %c0_11 = arith.constant 0 : index
    %17 = vector.load %arg1[%c1, %c0_11] : memref<8x128xi32, #tpu.memory_space<vmem>>, vector<1x128xi32>
    %c1_i32 = arith.constant 1 : i32
    %18 = vector.broadcast %c1_i32 : i32 to vector<1x128xi32>
    %19 = arith.cmpi sgt, %4, %18 : vector<1x128xi32>
    %c-1_i32_12 = arith.constant -1 : i32
    %20 = vector.broadcast %c-1_i32_12 : i32 to vector<1x128xi32>
    %21 = arith.select %19, %17, %20 : vector<1x128xi1>, vector<1x128xi32>
    %22 = vector.broadcast %21 : vector<1x128xi32> to vector<128x128xi32>
    %23 = arith.cmpi eq, %0, %22 : vector<128x128xi32>
    %24 = arith.extui %23 : vector<128x128xi1> to vector<128x128xi32>
    %25 = arith.sitofp %24 : vector<128x128xi32> to vector<128x128xf32>
    %26 = arith.addf %16, %25 : vector<128x128xf32>
    %c2 = arith.constant 2 : index
    %c0_13 = arith.constant 0 : index
    %27 = vector.load %arg1[%c2, %c0_13] : memref<8x128xi32, #tpu.memory_space<vmem>>, vector<1x128xi32>
    %c2_i32 = arith.constant 2 : i32
    %28 = vector.broadcast %c2_i32 : i32 to vector<1x128xi32>
    %29 = arith.cmpi sgt, %4, %28 : vector<1x128xi32>
    %c-1_i32_14 = arith.constant -1 : i32
    %30 = vector.broadcast %c-1_i32_14 : i32 to vector<1x128xi32>
    %31 = arith.select %29, %27, %30 : vector<1x128xi1>, vector<1x128xi32>
    %32 = vector.broadcast %31 : vector<1x128xi32> to vector<128x128xi32>
    %33 = arith.cmpi eq, %0, %32 : vector<128x128xi32>
    %34 = arith.extui %33 : vector<128x128xi1> to vector<128x128xi32>
    %35 = arith.sitofp %34 : vector<128x128xi32> to vector<128x128xf32>
    %36 = arith.addf %26, %35 : vector<128x128xf32>
    %c3 = arith.constant 3 : index
    %c0_15 = arith.constant 0 : index
    %37 = vector.load %arg1[%c3, %c0_15] : memref<8x128xi32, #tpu.memory_space<vmem>>, vector<1x128xi32>
    %c3_i32 = arith.constant 3 : i32
    %38 = vector.broadcast %c3_i32 : i32 to vector<1x128xi32>
    %39 = arith.cmpi sgt, %4, %38 : vector<1x128xi32>
    %c-1_i32_16 = arith.constant -1 : i32
    %40 = vector.broadcast %c-1_i32_16 : i32 to vector<1x128xi32>
    %41 = arith.select %39, %37, %40 : vector<1x128xi1>, vector<1x128xi32>
    %42 = vector.broadcast %41 : vector<1x128xi32> to vector<128x128xi32>
    %43 = arith.cmpi eq, %0, %42 : vector<128x128xi32>
    %44 = arith.extui %43 : vector<128x128xi1> to vector<128x128xi32>
    %45 = arith.sitofp %44 : vector<128x128xi32> to vector<128x128xf32>
    %46 = arith.addf %36, %45 : vector<128x128xf32>
    %c4 = arith.constant 4 : index
    %c0_17 = arith.constant 0 : index
    %47 = vector.load %arg1[%c4, %c0_17] : memref<8x128xi32, #tpu.memory_space<vmem>>, vector<1x128xi32>
    %c4_i32 = arith.constant 4 : i32
    %48 = vector.broadcast %c4_i32 : i32 to vector<1x128xi32>
    %49 = arith.cmpi sgt, %4, %48 : vector<1x128xi32>
    %c-1_i32_18 = arith.constant -1 : i32
    %50 = vector.broadcast %c-1_i32_18 : i32 to vector<1x128xi32>
    %51 = arith.select %49, %47, %50 : vector<1x128xi1>, vector<1x128xi32>
    %52 = vector.broadcast %51 : vector<1x128xi32> to vector<128x128xi32>
    %53 = arith.cmpi eq, %0, %52 : vector<128x128xi32>
    %54 = arith.extui %53 : vector<128x128xi1> to vector<128x128xi32>
    %55 = arith.sitofp %54 : vector<128x128xi32> to vector<128x128xf32>
    %56 = arith.addf %46, %55 : vector<128x128xf32>
    %c5 = arith.constant 5 : index
    %c0_19 = arith.constant 0 : index
    %57 = vector.load %arg1[%c5, %c0_19] : memref<8x128xi32, #tpu.memory_space<vmem>>, vector<1x128xi32>
    %c5_i32 = arith.constant 5 : i32
    %58 = vector.broadcast %c5_i32 : i32 to vector<1x128xi32>
    %59 = arith.cmpi sgt, %4, %58 : vector<1x128xi32>
    %c-1_i32_20 = arith.constant -1 : i32
    %60 = vector.broadcast %c-1_i32_20 : i32 to vector<1x128xi32>
    %61 = arith.select %59, %57, %60 : vector<1x128xi1>, vector<1x128xi32>
    %62 = vector.broadcast %61 : vector<1x128xi32> to vector<128x128xi32>
    %63 = arith.cmpi eq, %0, %62 : vector<128x128xi32>
    %64 = arith.extui %63 : vector<128x128xi1> to vector<128x128xi32>
    %65 = arith.sitofp %64 : vector<128x128xi32> to vector<128x128xf32>
    %66 = arith.addf %56, %65 : vector<128x128xf32>
    %c6 = arith.constant 6 : index
    %c0_21 = arith.constant 0 : index
    %67 = vector.load %arg1[%c6, %c0_21] : memref<8x128xi32, #tpu.memory_space<vmem>>, vector<1x128xi32>
    %c6_i32 = arith.constant 6 : i32
    %68 = vector.broadcast %c6_i32 : i32 to vector<1x128xi32>
    %69 = arith.cmpi sgt, %4, %68 : vector<1x128xi32>
    %c-1_i32_22 = arith.constant -1 : i32
    %70 = vector.broadcast %c-1_i32_22 : i32 to vector<1x128xi32>
    %71 = arith.select %69, %67, %70 : vector<1x128xi1>, vector<1x128xi32>
    %72 = vector.broadcast %71 : vector<1x128xi32> to vector<128x128xi32>
    %73 = arith.cmpi eq, %0, %72 : vector<128x128xi32>
    %74 = arith.extui %73 : vector<128x128xi1> to vector<128x128xi32>
    %75 = arith.sitofp %74 : vector<128x128xi32> to vector<128x128xf32>
    %76 = arith.addf %66, %75 : vector<128x128xf32>
    %c7 = arith.constant 7 : index
    %c0_23 = arith.constant 0 : index
    %77 = vector.load %arg1[%c7, %c0_23] : memref<8x128xi32, #tpu.memory_space<vmem>>, vector<1x128xi32>
    %c7_i32 = arith.constant 7 : i32
    %78 = vector.broadcast %c7_i32 : i32 to vector<1x128xi32>
    %79 = arith.cmpi sgt, %4, %78 : vector<1x128xi32>
    %c-1_i32_24 = arith.constant -1 : i32
    %80 = vector.broadcast %c-1_i32_24 : i32 to vector<1x128xi32>
    %81 = arith.select %79, %77, %80 : vector<1x128xi1>, vector<1x128xi32>
    %82 = vector.broadcast %81 : vector<1x128xi32> to vector<128x128xi32>
    %83 = arith.cmpi eq, %0, %82 : vector<128x128xi32>
    %84 = arith.extui %83 : vector<128x128xi1> to vector<128x128xi32>
    %85 = arith.sitofp %84 : vector<128x128xi32> to vector<128x128xf32>
    %86 = arith.addf %76, %85 : vector<128x128xf32>
    %cst_25 = arith.constant 0.000000e+00 : f32
    %87 = vector.broadcast %cst_25 : f32 to vector<128x128xf32>
    %c0_26 = arith.constant 0 : index
    %c0_27 = arith.constant 0 : index
    %88 = vector.load %arg2[%c0_26, %c0_27] : memref<8x128xi32, #tpu.memory_space<vmem>>, vector<1x128xi32>
    %c0_i32_28 = arith.constant 0 : i32
    %89 = vector.broadcast %c0_i32_28 : i32 to vector<1x128xi32>
    %90 = arith.cmpi sgt, %5, %89 : vector<1x128xi32>
    %c-1_i32_29 = arith.constant -1 : i32
    %91 = vector.broadcast %c-1_i32_29 : i32 to vector<1x128xi32>
    %92 = arith.select %90, %88, %91 : vector<1x128xi1>, vector<1x128xi32>
    %93 = vector.broadcast %92 : vector<1x128xi32> to vector<128x128xi32>
    %94 = arith.cmpi eq, %0, %93 : vector<128x128xi32>
    %95 = arith.extui %94 : vector<128x128xi1> to vector<128x128xi32>
    %96 = arith.sitofp %95 : vector<128x128xi32> to vector<128x128xf32>
    %97 = arith.addf %87, %96 : vector<128x128xf32>
    %c1_30 = arith.constant 1 : index
    %c0_31 = arith.constant 0 : index
    %98 = vector.load %arg2[%c1_30, %c0_31] : memref<8x128xi32, #tpu.memory_space<vmem>>, vector<1x128xi32>
    %c1_i32_32 = arith.constant 1 : i32
    %99 = vector.broadcast %c1_i32_32 : i32 to vector<1x128xi32>
    %100 = arith.cmpi sgt, %5, %99 : vector<1x128xi32>
    %c-1_i32_33 = arith.constant -1 : i32
    %101 = vector.broadcast %c-1_i32_33 : i32 to vector<1x128xi32>
    %102 = arith.select %100, %98, %101 : vector<1x128xi1>, vector<1x128xi32>
    %103 = vector.broadcast %102 : vector<1x128xi32> to vector<128x128xi32>
    %104 = arith.cmpi eq, %0, %103 : vector<128x128xi32>
    %105 = arith.extui %104 : vector<128x128xi1> to vector<128x128xi32>
    %106 = arith.sitofp %105 : vector<128x128xi32> to vector<128x128xf32>
    %107 = arith.addf %97, %106 : vector<128x128xf32>
    %c2_34 = arith.constant 2 : index
    %c0_35 = arith.constant 0 : index
    %108 = vector.load %arg2[%c2_34, %c0_35] : memref<8x128xi32, #tpu.memory_space<vmem>>, vector<1x128xi32>
    %c2_i32_36 = arith.constant 2 : i32
    %109 = vector.broadcast %c2_i32_36 : i32 to vector<1x128xi32>
    %110 = arith.cmpi sgt, %5, %109 : vector<1x128xi32>
    %c-1_i32_37 = arith.constant -1 : i32
    %111 = vector.broadcast %c-1_i32_37 : i32 to vector<1x128xi32>
    %112 = arith.select %110, %108, %111 : vector<1x128xi1>, vector<1x128xi32>
    %113 = vector.broadcast %112 : vector<1x128xi32> to vector<128x128xi32>
    %114 = arith.cmpi eq, %0, %113 : vector<128x128xi32>
    %115 = arith.extui %114 : vector<128x128xi1> to vector<128x128xi32>
    %116 = arith.sitofp %115 : vector<128x128xi32> to vector<128x128xf32>
    %117 = arith.addf %107, %116 : vector<128x128xf32>
    %c3_38 = arith.constant 3 : index
    %c0_39 = arith.constant 0 : index
    %118 = vector.load %arg2[%c3_38, %c0_39] : memref<8x128xi32, #tpu.memory_space<vmem>>, vector<1x128xi32>
    %c3_i32_40 = arith.constant 3 : i32
    %119 = vector.broadcast %c3_i32_40 : i32 to vector<1x128xi32>
    %120 = arith.cmpi sgt, %5, %119 : vector<1x128xi32>
    %c-1_i32_41 = arith.constant -1 : i32
    %121 = vector.broadcast %c-1_i32_41 : i32 to vector<1x128xi32>
    %122 = arith.select %120, %118, %121 : vector<1x128xi1>, vector<1x128xi32>
    %123 = vector.broadcast %122 : vector<1x128xi32> to vector<128x128xi32>
    %124 = arith.cmpi eq, %0, %123 : vector<128x128xi32>
    %125 = arith.extui %124 : vector<128x128xi1> to vector<128x128xi32>
    %126 = arith.sitofp %125 : vector<128x128xi32> to vector<128x128xf32>
    %127 = arith.addf %117, %126 : vector<128x128xf32>
    %c4_42 = arith.constant 4 : index
    %c0_43 = arith.constant 0 : index
    %128 = vector.load %arg2[%c4_42, %c0_43] : memref<8x128xi32, #tpu.memory_space<vmem>>, vector<1x128xi32>
    %c4_i32_44 = arith.constant 4 : i32
    %129 = vector.broadcast %c4_i32_44 : i32 to vector<1x128xi32>
    %130 = arith.cmpi sgt, %5, %129 : vector<1x128xi32>
    %c-1_i32_45 = arith.constant -1 : i32
    %131 = vector.broadcast %c-1_i32_45 : i32 to vector<1x128xi32>
    %132 = arith.select %130, %128, %131 : vector<1x128xi1>, vector<1x128xi32>
    %133 = vector.broadcast %132 : vector<1x128xi32> to vector<128x128xi32>
    %134 = arith.cmpi eq, %0, %133 : vector<128x128xi32>
    %135 = arith.extui %134 : vector<128x128xi1> to vector<128x128xi32>
    %136 = arith.sitofp %135 : vector<128x128xi32> to vector<128x128xf32>
    %137 = arith.addf %127, %136 : vector<128x128xf32>
    %c5_46 = arith.constant 5 : index
    %c0_47 = arith.constant 0 : index
    %138 = vector.load %arg2[%c5_46, %c0_47] : memref<8x128xi32, #tpu.memory_space<vmem>>, vector<1x128xi32>
    %c5_i32_48 = arith.constant 5 : i32
    %139 = vector.broadcast %c5_i32_48 : i32 to vector<1x128xi32>
    %140 = arith.cmpi sgt, %5, %139 : vector<1x128xi32>
    %c-1_i32_49 = arith.constant -1 : i32
    %141 = vector.broadcast %c-1_i32_49 : i32 to vector<1x128xi32>
    %142 = arith.select %140, %138, %141 : vector<1x128xi1>, vector<1x128xi32>
    %143 = vector.broadcast %142 : vector<1x128xi32> to vector<128x128xi32>
    %144 = arith.cmpi eq, %0, %143 : vector<128x128xi32>
    %145 = arith.extui %144 : vector<128x128xi1> to vector<128x128xi32>
    %146 = arith.sitofp %145 : vector<128x128xi32> to vector<128x128xf32>
    %147 = arith.addf %137, %146 : vector<128x128xf32>
    %c6_50 = arith.constant 6 : index
    %c0_51 = arith.constant 0 : index
    %148 = vector.load %arg2[%c6_50, %c0_51] : memref<8x128xi32, #tpu.memory_space<vmem>>, vector<1x128xi32>
    %c6_i32_52 = arith.constant 6 : i32
    %149 = vector.broadcast %c6_i32_52 : i32 to vector<1x128xi32>
    %150 = arith.cmpi sgt, %5, %149 : vector<1x128xi32>
    %c-1_i32_53 = arith.constant -1 : i32
    %151 = vector.broadcast %c-1_i32_53 : i32 to vector<1x128xi32>
    %152 = arith.select %150, %148, %151 : vector<1x128xi1>, vector<1x128xi32>
    %153 = vector.broadcast %152 : vector<1x128xi32> to vector<128x128xi32>
    %154 = arith.cmpi eq, %0, %153 : vector<128x128xi32>
    %155 = arith.extui %154 : vector<128x128xi1> to vector<128x128xi32>
    %156 = arith.sitofp %155 : vector<128x128xi32> to vector<128x128xf32>
    %157 = arith.addf %147, %156 : vector<128x128xf32>
    %c7_54 = arith.constant 7 : index
    %c0_55 = arith.constant 0 : index
    %158 = vector.load %arg2[%c7_54, %c0_55] : memref<8x128xi32, #tpu.memory_space<vmem>>, vector<1x128xi32>
    %c7_i32_56 = arith.constant 7 : i32
    %159 = vector.broadcast %c7_i32_56 : i32 to vector<1x128xi32>
    %160 = arith.cmpi sgt, %5, %159 : vector<1x128xi32>
    %c-1_i32_57 = arith.constant -1 : i32
    %161 = vector.broadcast %c-1_i32_57 : i32 to vector<1x128xi32>
    %162 = arith.select %160, %158, %161 : vector<1x128xi1>, vector<1x128xi32>
    %163 = vector.broadcast %162 : vector<1x128xi32> to vector<128x128xi32>
    %164 = arith.cmpi eq, %0, %163 : vector<128x128xi32>
    %165 = arith.extui %164 : vector<128x128xi1> to vector<128x128xi32>
    %166 = arith.sitofp %165 : vector<128x128xi32> to vector<128x128xf32>
    %167 = arith.addf %157, %166 : vector<128x128xf32>
    %168 = tpu.concatenate %86, %167 in 1 : vector<128x128xf32>, vector<128x128xf32> -> vector<128x256xf32>
    %169 = arith.truncf %168 : vector<128x256xf32> to vector<128x256xbf16>
    %c0_58 = arith.constant 0 : index
    %c0_59 = arith.constant 0 : index
    %170 = vector.load %arg5[%c0_58, %c0_59] : memref<32x128xbf16, #tpu.memory_space<vmem>>, vector<32x128xbf16>
    %cst_60 = arith.constant dense<0.000000e+00> : vector<32x256xf32>
    %171 = tpu.matmul %170, %169, %cst_60 {dimension_numbers = #tpu.dot_dimension_numbers<[1], [0], [0], [1], [0, 0, 1, 1], [], []>} : vector<32x128xbf16>, vector<128x256xbf16>, vector<32x256xf32> -> vector<32x256xf32>
    %172 = vector.extract_strided_slice %171 {offsets = [0, 0], sizes = [32, 128], strides = [1, 1]} : vector<32x256xf32> to vector<32x128xf32>
    %173 = arith.sitofp %4 : vector<1x128xi32> to vector<1x128xf32>
    %cst_61 = arith.constant 1.000000e+00 : f32
    %174 = vector.broadcast %cst_61 : f32 to vector<1x128xf32>
    %175 = arith.divf %174, %173 : vector<1x128xf32>
    %176 = vector.broadcast %175 : vector<1x128xf32> to vector<32x128xf32>
    %177 = arith.mulf %172, %176 : vector<32x128xf32>
    %178 = vector.extract_strided_slice %171 {offsets = [0, 128], sizes = [32, 128], strides = [1, 1]} : vector<32x256xf32> to vector<32x128xf32>
    %179 = arith.sitofp %5 : vector<1x128xi32> to vector<1x128xf32>
    %cst_62 = arith.constant 1.000000e+00 : f32
    %180 = vector.broadcast %cst_62 : f32 to vector<1x128xf32>
    %181 = arith.divf %180, %179 : vector<1x128xf32>
    %182 = vector.broadcast %181 : vector<1x128xf32> to vector<32x128xf32>
    %183 = arith.mulf %178, %182 : vector<32x128xf32>
    %184 = tpu.concatenate %177, %183 in 0 : vector<32x128xf32>, vector<32x128xf32> -> vector<64x128xf32>
    %c0_63 = arith.constant 0 : index
    %c0_64 = arith.constant 0 : index
    %185 = vector.load %arg6[%c0_63, %c0_64] : memref<32x64xf32, #tpu.memory_space<vmem>>, vector<32x64xf32>
    %cst_65 = arith.constant dense<0.000000e+00> : vector<32x128xf32>
    %186 = tpu.matmul %185, %184, %cst_65 {dimension_numbers = #tpu.dot_dimension_numbers<[1], [0], [0], [1], [0, 0, 1, 1], [], []>} : vector<32x64xf32>, vector<64x128xf32>, vector<32x128xf32> -> vector<32x128xf32>
    %187 = vector.broadcast %1 : vector<32x1xf32> to vector<32x128xf32>
    %188 = arith.addf %186, %187 : vector<32x128xf32>
    %cst_66 = arith.constant 0.000000e+00 : f32
    %189 = vector.broadcast %cst_66 : f32 to vector<32x128xf32>
    %190 = arith.maximumf %188, %189 : vector<32x128xf32>
    %191 = vector.broadcast %2 : vector<32x1xf32> to vector<32x128xf32>
    %192 = arith.mulf %190, %191 : vector<32x128xf32>
    %cst_67 = arith.constant dense<0.000000e+00> : vector<128xf32>
    %193 = vector.multi_reduction <add>, %192, %cst_67 [0] : vector<32x128xf32> to vector<128xf32>
    %194 = vector.shape_cast %193 : vector<128xf32> to vector<1x128xf32>
    %195 = vector.broadcast %3 : vector<1x1xf32> to vector<1x128xf32>
    %196 = arith.addf %194, %195 : vector<1x128xf32>
    %197 = math.tanh %196 : vector<1x128xf32>
    %c0_68 = arith.constant 0 : index
    %c0_69 = arith.constant 0 : index
    %198 = vector.load %arg10[%c0_68, %c0_69] : memref<1x128xf32, #tpu.memory_space<vmem>>, vector<1x128xf32>
    tpu.vector_store %arg10[%c0_68, %c0_69], %197 {strides = array<i32>} : memref<1x128xf32, #tpu.memory_space<vmem>>, vector<1x128xf32>,
    return
  }
  func.func @transform_0(%arg0: i32) -> (i32, i32) {
    %c0_i32 = arith.constant 0 : i32
    %c0_i32_0 = arith.constant 0 : i32
    return %c0_i32, %arg0 : i32, i32
  }
  func.func @transform_1(%arg0: i32) -> (i32, i32) {
    %c0_i32 = arith.constant 0 : i32
    %c0_i32_0 = arith.constant 0 : i32
    return %c0_i32, %arg0 : i32, i32
  }
  func.func @transform_2(%arg0: i32) -> (i32, i32) {
    %c0_i32 = arith.constant 0 : i32
    %c0_i32_0 = arith.constant 0 : i32
    return %c0_i32, %arg0 : i32, i32
  }
  func.func @transform_3(%arg0: i32) -> (i32, i32) {
    %c0_i32 = arith.constant 0 : i32
    %c0_i32_0 = arith.constant 0 : i32
    return %c0_i32, %arg0 : i32, i32
  }
  func.func @transform_4(%arg0: i32) -> (i32, i32) {
    %c0_i32 = arith.constant 0 : i32
    %c0_i32_0 = arith.constant 0 : i32
    %c0_i32_1 = arith.constant 0 : i32
    return %c0_i32, %c0_i32_0 : i32, i32
  }
  func.func @transform_5(%arg0: i32) -> (i32, i32) {
    %c0_i32 = arith.constant 0 : i32
    %c0_i32_0 = arith.constant 0 : i32
    %c0_i32_1 = arith.constant 0 : i32
    return %c0_i32, %c0_i32_0 : i32, i32
  }
  func.func @transform_6(%arg0: i32) -> (i32, i32) {
    %c0_i32 = arith.constant 0 : i32
    %c0_i32_0 = arith.constant 0 : i32
    %c0_i32_1 = arith.constant 0 : i32
    return %c0_i32, %c0_i32_0 : i32, i32
  }
  func.func @transform_7(%arg0: i32) -> (i32, i32) {
    %c0_i32 = arith.constant 0 : i32
    %c0_i32_0 = arith.constant 0 : i32
    %c0_i32_1 = arith.constant 0 : i32
    return %c0_i32, %c0_i32_0 : i32, i32
  }
  func.func @transform_8(%arg0: i32) -> (i32, i32) {
    %c0_i32 = arith.constant 0 : i32
    %c0_i32_0 = arith.constant 0 : i32
    %c0_i32_1 = arith.constant 0 : i32
    return %c0_i32, %c0_i32_0 : i32, i32
  }
  func.func @transform_9(%arg0: i32) -> (i32, i32) {
    %c0_i32 = arith.constant 0 : i32
    %c0_i32_0 = arith.constant 0 : i32
    return %c0_i32, %arg0 : i32, i32
  }
}

</mosaic_0001>

<llo_original>
// kernel: tpu_custom_call.1
$region0: #{tpu_custom_call.1}
  #allocation0 [shape = 'u32[]', space=smem, size = 0x4, offset = 0x4, fixed_abs, tag = 'smem constant byte address 0x4 - core index']
  #allocation1 [shape = 'u32[144,128]{1,0:T(1,128)}', space=vmem, size = 0x12000, scoped, tag = 'internal scratch']
  #allocation2 [shape = 'f32[1,1]{1,0:T(1,128)S(1)}', space=vmem, size = 0x200, scoped, tag = 'scoped memory for tpu_custom_call.1']
  %s0 = inlined_call_operand.vmem [shape: s32[8,128], index: 0, kind: input, shape index: {}]
  %s1 = inlined_call_operand.vmem [shape: s32[8,128], index: 1, kind: input, shape index: {}]
  %s2 = inlined_call_operand.vmem [shape: s32[1,128], index: 2, kind: input, shape index: {}]
  %s3 = inlined_call_operand.vmem [shape: s32[1,128], index: 3, kind: input, shape index: {}]
  %s4 = inlined_call_operand.vmem [shape: bf16[32,128], index: 4, kind: input, shape index: {}]
  %s5 = inlined_call_operand.vmem [shape: f32[32,64], index: 5, kind: input, shape index: {}]
  %s6 = inlined_call_operand.vmem [shape: f32[32,1], index: 6, kind: input, shape index: {}]
  %s7 = inlined_call_operand.vmem [shape: f32[32,1], index: 7, kind: input, shape index: {}]
  %s8 = inlined_call_operand.<no memory space> [shape: f32[1,1], index: 8, kind: input, shape index: {}]
  %s9 = inlined_call_operand.hbm [shape: f32[1,128], index: 9, kind: output, shape index: {}]
  %s10 = sld [smem:[#allocation0]]
  $region46: #{tpu_custom_call.1} parent=0
    _
  %s12 = ssub.s32 1, %s10
  %s13 = scalar_select 0, %s12, %s10
  %v14 = vstv %s8
  %15 = vst [vmem:[#allocation2] sm:$0x1] %v14
  $region1: #{tpu_custom_call.1} parent=0
    #allocation3 [shape = 'u8[512]{0}', space=vmem, size = 0x400, scoped, tag = 'output window, operand 0, single buffered']
    #allocation4 [shape = 's32[1]{0}', space=sflag, size = 0x4, scoped, tag = 'scoped memory for tpu_custom_call.1']
    %16 = vsyncpa [#allocation4], 0
    // Predicated region
    $region2: #{tpu_custom_call.1} parent=1 // pred_check
      _
    $region3: #{tpu_custom_call.1} parent=1 // pred_check_branch
      %18 = sbr.rel (0) target = $region5
    $region4: #{tpu_custom_call.1} parent=1 // pred_region
      _
    $region5: #{tpu_custom_call.1} parent=1 // pred_fallthru
      _
    // Predicated region
    $region6: #{tpu_custom_call.1} parent=1 // pred_check
      _
    $region7: #{tpu_custom_call.1} parent=1 // pred_check_branch
      %20 = sbr.rel (0) target = $region9
    $region8: #{tpu_custom_call.1} parent=1 // pred_region
      _
    $region9: #{tpu_custom_call.1} parent=1 // pred_fallthru
      _
    // Predicated region
    $region10: #{tpu_custom_call.1} parent=1 // pred_check
      _
    $region11: #{tpu_custom_call.1} parent=1 // pred_check_branch
      %22 = sbr.rel (0) target = $region13
    $region12: #{tpu_custom_call.1} parent=1 // pred_region
      _
    $region13: #{tpu_custom_call.1} parent=1 // pred_fallthru
      _
    // Predicated region
    $region14: #{tpu_custom_call.1} parent=1 // pred_check
      _
    $region15: #{tpu_custom_call.1} parent=1 // pred_check_branch
      %24 = sbr.rel (0) target = $region17
    $region16: #{tpu_custom_call.1} parent=1 // pred_region
      _
    $region17: #{tpu_custom_call.1} parent=1 // pred_fallthru
      _
    // Predicated region
    $region18: #{tpu_custom_call.1} parent=1 // pred_check
      _
    $region19: #{tpu_custom_call.1} parent=1 // pred_check_branch
      %26 = sbr.rel (0) target = $region21
    $region20: #{tpu_custom_call.1} parent=1 // pred_region
      _
    $region21: #{tpu_custom_call.1} parent=1 // pred_fallthru
      _
    // Predicated region
    $region22: #{tpu_custom_call.1} parent=1 // pred_check
      _
    $region23: #{tpu_custom_call.1} parent=1 // pred_check_branch
      %28 = sbr.rel (0) target = $region25
    $region24: #{tpu_custom_call.1} parent=1 // pred_region
      _
    $region25: #{tpu_custom_call.1} parent=1 // pred_fallthru
      _
    // Predicated region
    $region26: #{tpu_custom_call.1} parent=1 // pred_check
      _
    $region27: #{tpu_custom_call.1} parent=1 // pred_check_branch
      %30 = sbr.rel (0) target = $region29
    $region28: #{tpu_custom_call.1} parent=1 // pred_region
      _
    $region29: #{tpu_custom_call.1} parent=1 // pred_fallthru
      _
    // Predicated region
    $region30: #{tpu_custom_call.1} parent=1 // pred_check
      _
    $region31: #{tpu_custom_call.1} parent=1 // pred_check_branch
      %32 = sbr.rel (0) target = $region33
    $region32: #{tpu_custom_call.1} parent=1 // pred_region
      _
    $region33: #{tpu_custom_call.1} parent=1 // pred_fallthru
      _
    // Predicated region
    $region34: #{tpu_custom_call.1} parent=1 // pred_check
      _
    $region35: #{tpu_custom_call.1} parent=1 // pred_check_branch
      %34 = sbr.rel (0) target = $region37
    $region36: #{tpu_custom_call.1} parent=1 // pred_region
      _
    $region37: #{tpu_custom_call.1} parent=1 // pred_fallthru
      _
    %v36 = vlaneseq
    %v37 = vshrl.u32 %v36, 7
    %v38 = vadd.s32 %v37, 8
    %v39 = vadd.s32 %v37, 16
    %v40 = vadd.s32 %v37, 24
    %v41 = vadd.s32 %v37, 32
    %v42 = vadd.s32 %v37, 40
    %v43 = vadd.s32 %v37, 48
    %v44 = vadd.s32 %v37, 56
    %v45 = vadd.s32 %v37, 64
    %v46 = vadd.s32 %v37, 72
    %v47 = vadd.s32 %v37, 80
    %v48 = vadd.s32 %v37, 88
    %v49 = vadd.s32 %v37, 96
    %v50 = vadd.s32 %v37, 104
    %v51 = vadd.s32 %v37, 112
    %v52 = vadd.s32 %v37, 120
    %v53 = vld [vmem:[%s6] sm:$0xff]
    %v54 = vld [vmem:[%s6 + $0x8] sm:$0xff]
    %v55 = vld [vmem:[%s6 + $0x10] sm:$0xff]
    %v56 = vld [vmem:[%s6 + $0x18] sm:$0xff]
    %v57 = vld [vmem:[%s7] sm:$0xff]
    %v58 = vld [vmem:[%s7 + $0x8] sm:$0xff]
    %v59 = vld [vmem:[%s7 + $0x10] sm:$0xff]
    %v60 = vld [vmem:[%s7 + $0x18] sm:$0xff]
    %v61 = vld [vmem:[#allocation2] sm:$0x1]
    %v62 = vld [vmem:[%s2] sm:$0x1]
    %v63 = vld [vmem:[%s3] sm:$0x1]
    %v64 = vld [vmem:[%s0] sm:$0x1]
    %vm65 = vcmp.gt.s32.totalorder %v62, 0
    %v66 = vsel %vm65, %v64, 4294967295
    %v67 = vlaneseq
    %v68 = vshrl.u32 %v67, 7
    %v69 = vsub.s32 0, %v68
    %v70 = vrot.slane %v66, %v69
    %vm71 = vcmp.eq.s32.totalorder %v37, %v70
    %vm72 = vcmp.eq.s32.totalorder %v38, %v70
    %vm73 = vcmp.eq.s32.totalorder %v39, %v70
    %vm74 = vcmp.eq.s32.totalorder %v40, %v70
    %vm75 = vcmp.eq.s32.totalorder %v41, %v70
    %vm76 = vcmp.eq.s32.totalorder %v42, %v70
    %vm77 = vcmp.eq.s32.totalorder %v43, %v70
    %vm78 = vcmp.eq.s32.totalorder %v44, %v70
    %vm79 = vcmp.eq.s32.totalorder %v45, %v70
    %vm80 = vcmp.eq.s32.totalorder %v46, %v70
    %vm81 = vcmp.eq.s32.totalorder %v47, %v70
    %vm82 = vcmp.eq.s32.totalorder %v48, %v70
    %vm83 = vcmp.eq.s32.totalorder %v49, %v70
    %vm84 = vcmp.eq.s32.totalorder %v50, %v70
    %vm85 = vcmp.eq.s32.totalorder %v51, %v70
    %vm86 = vcmp.eq.s32.totalorder %v52, %v70
    %v87 = vsel %vm71, 1, 0
    %v88 = vsel %vm72, 1, 0
    %v89 = vsel %vm73, 1, 0
    %v90 = vsel %vm74, 1, 0
    %v91 = vsel %vm75, 1, 0
    %v92 = vsel %vm76, 1, 0
    %v93 = vsel %vm77, 1, 0
    %v94 = vsel %vm78, 1, 0
    %v95 = vsel %vm79, 1, 0
    %v96 = vsel %vm80, 1, 0
    %v97 = vsel %vm81, 1, 0
    %v98 = vsel %vm82, 1, 0
    %v99 = vsel %vm83, 1, 0
    %v100 = vsel %vm84, 1, 0
    %v101 = vsel %vm85, 1, 0
    %v102 = vsel %vm86, 1, 0
    %v103 = vcvt.s32.f32 %v87
    %v104 = vcvt.s32.f32 %v88
    %v105 = vcvt.s32.f32 %v89
    %v106 = vcvt.s32.f32 %v90
    %v107 = vcvt.s32.f32 %v91
    %v108 = vcvt.s32.f32 %v92
    %v109 = vcvt.s32.f32 %v93
    %v110 = vcvt.s32.f32 %v94
    %v111 = vcvt.s32.f32 %v95
    %v112 = vcvt.s32.f32 %v96
    %v113 = vcvt.s32.f32 %v97
    %v114 = vcvt.s32.f32 %v98
    %v115 = vcvt.s32.f32 %v99
    %v116 = vcvt.s32.f32 %v100
    %v117 = vcvt.s32.f32 %v101
    %v118 = vcvt.s32.f32 %v102
    %v119 = vadd.f32 %v103, 0.0
    %v120 = vadd.f32 %v104, 0.0
    %v121 = vadd.f32 %v105, 0.0
    %v122 = vadd.f32 %v106, 0.0
    %v123 = vadd.f32 %v107, 0.0
    %v124 = vadd.f32 %v108, 0.0
    %v125 = vadd.f32 %v109, 0.0
    %v126 = vadd.f32 %v110, 0.0
    %v127 = vadd.f32 %v111, 0.0
    %v128 = vadd.f32 %v112, 0.0
    %v129 = vadd.f32 %v113, 0.0
    %v130 = vadd.f32 %v114, 0.0
    %v131 = vadd.f32 %v115, 0.0
    %v132 = vadd.f32 %v116, 0.0
    %v133 = vadd.f32 %v117, 0.0
    %v134 = vadd.f32 %v118, 0.0
    %v135 = vld [vmem:[%s0 + $0x1] sm:$0x1]
    %vm136 = vcmp.gt.s32.totalorder %v62, 1
    %v137 = vsel %vm136, %v135, 4294967295
    %v138 = vlaneseq
    %v139 = vshrl.u32 %v138, 7
    %v140 = vsub.s32 0, %v139
    %v141 = vrot.slane %v137, %v140
    %vm142 = vcmp.eq.s32.totalorder %v37, %v141
    %vm143 = vcmp.eq.s32.totalorder %v38, %v141
    %vm144 = vcmp.eq.s32.totalorder %v39, %v141
    %vm145 = vcmp.eq.s32.totalorder %v40, %v141
    %vm146 = vcmp.eq.s32.totalorder %v41, %v141
    %vm147 = vcmp.eq.s32.totalorder %v42, %v141
    %vm148 = vcmp.eq.s32.totalorder %v43, %v141
    %vm149 = vcmp.eq.s32.totalorder %v44, %v141
    %vm150 = vcmp.eq.s32.totalorder %v45, %v141
    %vm151 = vcmp.eq.s32.totalorder %v46, %v141
    %vm152 = vcmp.eq.s32.totalorder %v47, %v141
    %vm153 = vcmp.eq.s32.totalorder %v48, %v141
    %vm154 = vcmp.eq.s32.totalorder %v49, %v141
    %vm155 = vcmp.eq.s32.totalorder %v50, %v141
    %vm156 = vcmp.eq.s32.totalorder %v51, %v141
    %vm157 = vcmp.eq.s32.totalorder %v52, %v141
    %v158 = vsel %vm142, 1, 0
    %v159 = vsel %vm143, 1, 0
    %v160 = vsel %vm144, 1, 0
    %v161 = vsel %vm145, 1, 0
    %v162 = vsel %vm146, 1, 0
    %v163 = vsel %vm147, 1, 0
    %v164 = vsel %vm148, 1, 0
    %v165 = vsel %vm149, 1, 0
    %v166 = vsel %vm150, 1, 0
    %v167 = vsel %vm151, 1, 0
    %v168 = vsel %vm152, 1, 0
    %v169 = vsel %vm153, 1, 0
    %v170 = vsel %vm154, 1, 0
    %v171 = vsel %vm155, 1, 0
    %v172 = vsel %vm156, 1, 0
    %v173 = vsel %vm157, 1, 0
    %v174 = vcvt.s32.f32 %v158
    %v175 = vcvt.s32.f32 %v159
    %v176 = vcvt.s32.f32 %v160
    %v177 = vcvt.s32.f32 %v161
    %v178 = vcvt.s32.f32 %v162
    %v179 = vcvt.s32.f32 %v163
    %v180 = vcvt.s32.f32 %v164
    %v181 = vcvt.s32.f32 %v165
    %v182 = vcvt.s32.f32 %v166
    %v183 = vcvt.s32.f32 %v167
    %v184 = vcvt.s32.f32 %v168
    %v185 = vcvt.s32.f32 %v169
    %v186 = vcvt.s32.f32 %v170
    %v187 = vcvt.s32.f32 %v171
    %v188 = vcvt.s32.f32 %v172
    %v189 = vcvt.s32.f32 %v173
    %v190 = vadd.f32 %v119, %v174
    %v191 = vadd.f32 %v120, %v175
    %v192 = vadd.f32 %v121, %v176
    %v193 = vadd.f32 %v122, %v177
    %v194 = vadd.f32 %v123, %v178
    %v195 = vadd.f32 %v124, %v179
    %v196 = vadd.f32 %v125, %v180
    %v197 = vadd.f32 %v126, %v181
    %v198 = vadd.f32 %v127, %v182
    %v199 = vadd.f32 %v128, %v183
    %v200 = vadd.f32 %v129, %v184
    %v201 = vadd.f32 %v130, %v185
    %v202 = vadd.f32 %v131, %v186
    %v203 = vadd.f32 %v132, %v187
    %v204 = vadd.f32 %v133, %v188
    %v205 = vadd.f32 %v134, %v189
    %v206 = vld [vmem:[%s0 + $0x2] sm:$0x1]
    %vm207 = vcmp.gt.s32.totalorder %v62, 2
    %v208 = vsel %vm207, %v206, 4294967295
    %v209 = vlaneseq
    %v210 = vshrl.u32 %v209, 7
    %v211 = vsub.s32 0, %v210
    %v212 = vrot.slane %v208, %v211
    %vm213 = vcmp.eq.s32.totalorder %v37, %v212
    %vm214 = vcmp.eq.s32.totalorder %v38, %v212
    %vm215 = vcmp.eq.s32.totalorder %v39, %v212
    %vm216 = vcmp.eq.s32.totalorder %v40, %v212
    %vm217 = vcmp.eq.s32.totalorder %v41, %v212
    %vm218 = vcmp.eq.s32.totalorder %v42, %v212
    %vm219 = vcmp.eq.s32.totalorder %v43, %v212
    %vm220 = vcmp.eq.s32.totalorder %v44, %v212
    %vm221 = vcmp.eq.s32.totalorder %v45, %v212
    %vm222 = vcmp.eq.s32.totalorder %v46, %v212
    %vm223 = vcmp.eq.s32.totalorder %v47, %v212
    %vm224 = vcmp.eq.s32.totalorder %v48, %v212
    %vm225 = vcmp.eq.s32.totalorder %v49, %v212
    %vm226 = vcmp.eq.s32.totalorder %v50, %v212
    %vm227 = vcmp.eq.s32.totalorder %v51, %v212
    %vm228 = vcmp.eq.s32.totalorder %v52, %v212
    %v229 = vsel %vm213, 1, 0
    %v230 = vsel %vm214, 1, 0
    %v231 = vsel %vm215, 1, 0
    %v232 = vsel %vm216, 1, 0
    %v233 = vsel %vm217, 1, 0
    %v234 = vsel %vm218, 1, 0
    %v235 = vsel %vm219, 1, 0
    %v236 = vsel %vm220, 1, 0
    %v237 = vsel %vm221, 1, 0
    %v238 = vsel %vm222, 1, 0
    %v239 = vsel %vm223, 1, 0
    %v240 = vsel %vm224, 1, 0
    %v241 = vsel %vm225, 1, 0
    %v242 = vsel %vm226, 1, 0
    %v243 = vsel %vm227, 1, 0
    %v244 = vsel %vm228, 1, 0
    %v245 = vcvt.s32.f32 %v229
    %v246 = vcvt.s32.f32 %v230
    %v247 = vcvt.s32.f32 %v231
    %v248 = vcvt.s32.f32 %v232
    %v249 = vcvt.s32.f32 %v233
    %v250 = vcvt.s32.f32 %v234
    %v251 = vcvt.s32.f32 %v235
    %v252 = vcvt.s32.f32 %v236
    %v253 = vcvt.s32.f32 %v237
    %v254 = vcvt.s32.f32 %v238
    %v255 = vcvt.s32.f32 %v239
    %v256 = vcvt.s32.f32 %v240
    %v257 = vcvt.s32.f32 %v241
    %v258 = vcvt.s32.f32 %v242
    %v259 = vcvt.s32.f32 %v243
    %v260 = vcvt.s32.f32 %v244
    %v261 = vadd.f32 %v190, %v245
    %v262 = vadd.f32 %v191, %v246
    %v263 = vadd.f32 %v192, %v247
    %v264 = vadd.f32 %v193, %v248
    %v265 = vadd.f32 %v194, %v249
    %v266 = vadd.f32 %v195, %v250
    %v267 = vadd.f32 %v196, %v251
    %v268 = vadd.f32 %v197, %v252
    %v269 = vadd.f32 %v198, %v253
    %v270 = vadd.f32 %v199, %v254
    %v271 = vadd.f32 %v200, %v255
    %v272 = vadd.f32 %v201, %v256
    %v273 = vadd.f32 %v202, %v257
    %v274 = vadd.f32 %v203, %v258
    %v275 = vadd.f32 %v204, %v259
    %v276 = vadd.f32 %v205, %v260
    %v277 = vld [vmem:[%s0 + $0x3] sm:$0x1]
    %vm278 = vcmp.gt.s32.totalorder %v62, 3
    %v279 = vsel %vm278, %v277, 4294967295
    %v280 = vlaneseq
    %v281 = vshrl.u32 %v280, 7
    %v282 = vsub.s32 0, %v281
    %v283 = vrot.slane %v279, %v282
    %vm284 = vcmp.eq.s32.totalorder %v37, %v283
    %vm285 = vcmp.eq.s32.totalorder %v38, %v283
    %vm286 = vcmp.eq.s32.totalorder %v39, %v283
    %vm287 = vcmp.eq.s32.totalorder %v40, %v283
    %vm288 = vcmp.eq.s32.totalorder %v41, %v283
    %vm289 = vcmp.eq.s32.totalorder %v42, %v283
    %vm290 = vcmp.eq.s32.totalorder %v43, %v283
    %vm291 = vcmp.eq.s32.totalorder %v44, %v283
    %vm292 = vcmp.eq.s32.totalorder %v45, %v283
    %vm293 = vcmp.eq.s32.totalorder %v46, %v283
    %vm294 = vcmp.eq.s32.totalorder %v47, %v283
    %vm295 = vcmp.eq.s32.totalorder %v48, %v283
    %vm296 = vcmp.eq.s32.totalorder %v49, %v283
    %vm297 = vcmp.eq.s32.totalorder %v50, %v283
    %vm298 = vcmp.eq.s32.totalorder %v51, %v283
    %vm299 = vcmp.eq.s32.totalorder %v52, %v283
    %v300 = vsel %vm284, 1, 0
    %v301 = vsel %vm285, 1, 0
    %v302 = vsel %vm286, 1, 0
    %v303 = vsel %vm287, 1, 0
    %v304 = vsel %vm288, 1, 0
    %v305 = vsel %vm289, 1, 0
    %v306 = vsel %vm290, 1, 0
    %v307 = vsel %vm291, 1, 0
    %v308 = vsel %vm292, 1, 0
    %v309 = vsel %vm293, 1, 0
    %v310 = vsel %vm294, 1, 0
    %v311 = vsel %vm295, 1, 0
    %v312 = vsel %vm296, 1, 0
    %v313 = vsel %vm297, 1, 0
    %v314 = vsel %vm298, 1, 0
    %v315 = vsel %vm299, 1, 0
    %v316 = vcvt.s32.f32 %v300
    %v317 = vcvt.s32.f32 %v301
    %v318 = vcvt.s32.f32 %v302
    %v319 = vcvt.s32.f32 %v303
    %v320 = vcvt.s32.f32 %v304
    %v321 = vcvt.s32.f32 %v305
    %v322 = vcvt.s32.f32 %v306
    %v323 = vcvt.s32.f32 %v307
    %v324 = vcvt.s32.f32 %v308
    %v325 = vcvt.s32.f32 %v309
    %v326 = vcvt.s32.f32 %v310
    %v327 = vcvt.s32.f32 %v311
    %v328 = vcvt.s32.f32 %v312
    %v329 = vcvt.s32.f32 %v313
    %v330 = vcvt.s32.f32 %v314
    %v331 = vcvt.s32.f32 %v315
    %v332 = vadd.f32 %v261, %v316
    %v333 = vadd.f32 %v262, %v317
    %v334 = vadd.f32 %v263, %v318
    %v335 = vadd.f32 %v264, %v319
    %v336 = vadd.f32 %v265, %v320
    %v337 = vadd.f32 %v266, %v321
    %v338 = vadd.f32 %v267, %v322
    %v339 = vadd.f32 %v268, %v323
    %v340 = vadd.f32 %v269, %v324
    %v341 = vadd.f32 %v270, %v325
    %v342 = vadd.f32 %v271, %v326
    %v343 = vadd.f32 %v272, %v327
    %v344 = vadd.f32 %v273, %v328
    %v345 = vadd.f32 %v274, %v329
    %v346 = vadd.f32 %v275, %v330
    %v347 = vadd.f32 %v276, %v331
    %v348 = vld [vmem:[%s0 + $0x4] sm:$0x1]
    %vm349 = vcmp.gt.s32.totalorder %v62, 4
    %v350 = vsel %vm349, %v348, 4294967295
    %v351 = vlaneseq
    %v352 = vshrl.u32 %v351, 7
    %v353 = vsub.s32 0, %v352
    %v354 = vrot.slane %v350, %v353
    %vm355 = vcmp.eq.s32.totalorder %v37, %v354
    %vm356 = vcmp.eq.s32.totalorder %v38, %v354
    %vm357 = vcmp.eq.s32.totalorder %v39, %v354
    %vm358 = vcmp.eq.s32.totalorder %v40, %v354
    %vm359 = vcmp.eq.s32.totalorder %v41, %v354
    %vm360 = vcmp.eq.s32.totalorder %v42, %v354
    %vm361 = vcmp.eq.s32.totalorder %v43, %v354
    %vm362 = vcmp.eq.s32.totalorder %v44, %v354
    %vm363 = vcmp.eq.s32.totalorder %v45, %v354
    %vm364 = vcmp.eq.s32.totalorder %v46, %v354
    %vm365 = vcmp.eq.s32.totalorder %v47, %v354
    %vm366 = vcmp.eq.s32.totalorder %v48, %v354
    %vm367 = vcmp.eq.s32.totalorder %v49, %v354
    %vm368 = vcmp.eq.s32.totalorder %v50, %v354
    %vm369 = vcmp.eq.s32.totalorder %v51, %v354
    %vm370 = vcmp.eq.s32.totalorder %v52, %v354
    %v371 = vsel %vm355, 1, 0
    %v372 = vsel %vm356, 1, 0
    %v373 = vsel %vm357, 1, 0
    %v374 = vsel %vm358, 1, 0
    %v375 = vsel %vm359, 1, 0
    %v376 = vsel %vm360, 1, 0
    %v377 = vsel %vm361, 1, 0
    %v378 = vsel %vm362, 1, 0
    %v379 = vsel %vm363, 1, 0
    %v380 = vsel %vm364, 1, 0
    %v381 = vsel %vm365, 1, 0
    %v382 = vsel %vm366, 1, 0
    %v383 = vsel %vm367, 1, 0
    %v384 = vsel %vm368, 1, 0
    %v385 = vsel %vm369, 1, 0
    %v386 = vsel %vm370, 1, 0
    %v387 = vcvt.s32.f32 %v371
    %v388 = vcvt.s32.f32 %v372
    %v389 = vcvt.s32.f32 %v373
    %v390 = vcvt.s32.f32 %v374
    %v391 = vcvt.s32.f32 %v375
    %v392 = vcvt.s32.f32 %v376
    %v393 = vcvt.s32.f32 %v377
    %v394 = vcvt.s32.f32 %v378
    %v395 = vcvt.s32.f32 %v379
    %v396 = vcvt.s32.f32 %v380
    %v397 = vcvt.s32.f32 %v381
    %v398 = vcvt.s32.f32 %v382
    %v399 = vcvt.s32.f32 %v383
    %v400 = vcvt.s32.f32 %v384
    %v401 = vcvt.s32.f32 %v385
    %v402 = vcvt.s32.f32 %v386
    %v403 = vadd.f32 %v332, %v387
    %v404 = vadd.f32 %v333, %v388
    %v405 = vadd.f32 %v334, %v389
    %v406 = vadd.f32 %v335, %v390
    %v407 = vadd.f32 %v336, %v391
    %v408 = vadd.f32 %v337, %v392
    %v409 = vadd.f32 %v338, %v393
    %v410 = vadd.f32 %v339, %v394
    %v411 = vadd.f32 %v340, %v395
    %v412 = vadd.f32 %v341, %v396
    %v413 = vadd.f32 %v342, %v397
    %v414 = vadd.f32 %v343, %v398
    %v415 = vadd.f32 %v344, %v399
    %v416 = vadd.f32 %v345, %v400
    %v417 = vadd.f32 %v346, %v401
    %v418 = vadd.f32 %v347, %v402
    %v419 = vld [vmem:[%s0 + $0x5] sm:$0x1]
    %vm420 = vcmp.gt.s32.totalorder %v62, 5
    %v421 = vsel %vm420, %v419, 4294967295
    %v422 = vlaneseq
    %v423 = vshrl.u32 %v422, 7
    %v424 = vsub.s32 0, %v423
    %v425 = vrot.slane %v421, %v424
    %vm426 = vcmp.eq.s32.totalorder %v37, %v425
    %vm427 = vcmp.eq.s32.totalorder %v38, %v425
    %vm428 = vcmp.eq.s32.totalorder %v39, %v425
    %vm429 = vcmp.eq.s32.totalorder %v40, %v425
    %vm430 = vcmp.eq.s32.totalorder %v41, %v425
    %vm431 = vcmp.eq.s32.totalorder %v42, %v425
    %vm432 = vcmp.eq.s32.totalorder %v43, %v425
    %vm433 = vcmp.eq.s32.totalorder %v44, %v425
    %vm434 = vcmp.eq.s32.totalorder %v45, %v425
    %vm435 = vcmp.eq.s32.totalorder %v46, %v425
    %vm436 = vcmp.eq.s32.totalorder %v47, %v425
    %vm437 = vcmp.eq.s32.totalorder %v48, %v425
    %vm438 = vcmp.eq.s32.totalorder %v49, %v425
    %vm439 = vcmp.eq.s32.totalorder %v50, %v425
    %vm440 = vcmp.eq.s32.totalorder %v51, %v425
    %vm441 = vcmp.eq.s32.totalorder %v52, %v425
    %v442 = vsel %vm426, 1, 0
    %v443 = vsel %vm427, 1, 0
    %v444 = vsel %vm428, 1, 0
    %v445 = vsel %vm429, 1, 0
    %v446 = vsel %vm430, 1, 0
    %v447 = vsel %vm431, 1, 0
    %v448 = vsel %vm432, 1, 0
    %v449 = vsel %vm433, 1, 0
    %v450 = vsel %vm434, 1, 0
    %v451 = vsel %vm435, 1, 0
    %v452 = vsel %vm436, 1, 0
    %v453 = vsel %vm437, 1, 0
    %v454 = vsel %vm438, 1, 0
    %v455 = vsel %vm439, 1, 0
    %v456 = vsel %vm440, 1, 0
    %v457 = vsel %vm441, 1, 0
    %v458 = vcvt.s32.f32 %v442
    %v459 = vcvt.s32.f32 %v443
    %v460 = vcvt.s32.f32 %v444
    %v461 = vcvt.s32.f32 %v445
    %v462 = vcvt.s32.f32 %v446
    %v463 = vcvt.s32.f32 %v447
    %v464 = vcvt.s32.f32 %v448
    %v465 = vcvt.s32.f32 %v449
    %v466 = vcvt.s32.f32 %v450
    %v467 = vcvt.s32.f32 %v451
    %v468 = vcvt.s32.f32 %v452
    %v469 = vcvt.s32.f32 %v453
    %v470 = vcvt.s32.f32 %v454
    %v471 = vcvt.s32.f32 %v455
    %v472 = vcvt.s32.f32 %v456
    %v473 = vcvt.s32.f32 %v457
    %v474 = vadd.f32 %v403, %v458
    %v475 = vadd.f32 %v404, %v459
    %v476 = vadd.f32 %v405, %v460
    %v477 = vadd.f32 %v406, %v461
    %v478 = vadd.f32 %v407, %v462
    %v479 = vadd.f32 %v408, %v463
    %v480 = vadd.f32 %v409, %v464
    %v481 = vadd.f32 %v410, %v465
    %v482 = vadd.f32 %v411, %v466
    %v483 = vadd.f32 %v412, %v467
    %v484 = vadd.f32 %v413, %v468
    %v485 = vadd.f32 %v414, %v469
    %v486 = vadd.f32 %v415, %v470
    %v487 = vadd.f32 %v416, %v471
    %v488 = vadd.f32 %v417, %v472
    %v489 = vadd.f32 %v418, %v473
    %v490 = vld [vmem:[%s0 + $0x6] sm:$0x1]
    %vm491 = vcmp.gt.s32.totalorder %v62, 6
    %v492 = vsel %vm491, %v490, 4294967295
    %v493 = vlaneseq
    %v494 = vshrl.u32 %v493, 7
    %v495 = vsub.s32 0, %v494
    %v496 = vrot.slane %v492, %v495
    %vm497 = vcmp.eq.s32.totalorder %v37, %v496
    %vm498 = vcmp.eq.s32.totalorder %v38, %v496
    %vm499 = vcmp.eq.s32.totalorder %v39, %v496
    %vm500 = vcmp.eq.s32.totalorder %v40, %v496
    %vm501 = vcmp.eq.s32.totalorder %v41, %v496
    %vm502 = vcmp.eq.s32.totalorder %v42, %v496
    %vm503 = vcmp.eq.s32.totalorder %v43, %v496
    %vm504 = vcmp.eq.s32.totalorder %v44, %v496
    %vm505 = vcmp.eq.s32.totalorder %v45, %v496
    %vm506 = vcmp.eq.s32.totalorder %v46, %v496
    %vm507 = vcmp.eq.s32.totalorder %v47, %v496
    %vm508 = vcmp.eq.s32.totalorder %v48, %v496
    %vm509 = vcmp.eq.s32.totalorder %v49, %v496
    %vm510 = vcmp.eq.s32.totalorder %v50, %v496
    %vm511 = vcmp.eq.s32.totalorder %v51, %v496
    %vm512 = vcmp.eq.s32.totalorder %v52, %v496
    %v513 = vsel %vm497, 1, 0
    %v514 = vsel %vm498, 1, 0
    %v515 = vsel %vm499, 1, 0
    %v516 = vsel %vm500, 1, 0
    %v517 = vsel %vm501, 1, 0
    %v518 = vsel %vm502, 1, 0
    %v519 = vsel %vm503, 1, 0
    %v520 = vsel %vm504, 1, 0
    %v521 = vsel %vm505, 1, 0
    %v522 = vsel %vm506, 1, 0
    %v523 = vsel %vm507, 1, 0
    %v524 = vsel %vm508, 1, 0
    %v525 = vsel %vm509, 1, 0
    %v526 = vsel %vm510, 1, 0
    %v527 = vsel %vm511, 1, 0
    %v528 = vsel %vm512, 1, 0
    %v529 = vcvt.s32.f32 %v513
    %v530 = vcvt.s32.f32 %v514
    %v531 = vcvt.s32.f32 %v515
    %v532 = vcvt.s32.f32 %v516
    %v533 = vcvt.s32.f32 %v517
    %v534 = vcvt.s32.f32 %v518
    %v535 = vcvt.s32.f32 %v519
    %v536 = vcvt.s32.f32 %v520
    %v537 = vcvt.s32.f32 %v521
    %v538 = vcvt.s32.f32 %v522
    %v539 = vcvt.s32.f32 %v523
    %v540 = vcvt.s32.f32 %v524
    %v541 = vcvt.s32.f32 %v525
    %v542 = vcvt.s32.f32 %v526
    %v543 = vcvt.s32.f32 %v527
    %v544 = vcvt.s32.f32 %v528
    %v545 = vadd.f32 %v474, %v529
    %v546 = vadd.f32 %v475, %v530
    %v547 = vadd.f32 %v476, %v531
    %v548 = vadd.f32 %v477, %v532
    %v549 = vadd.f32 %v478, %v533
    %v550 = vadd.f32 %v479, %v534
    %v551 = vadd.f32 %v480, %v535
    %v552 = vadd.f32 %v481, %v536
    %v553 = vadd.f32 %v482, %v537
    %v554 = vadd.f32 %v483, %v538
    %v555 = vadd.f32 %v484, %v539
    %v556 = vadd.f32 %v485, %v540
    %v557 = vadd.f32 %v486, %v541
    %v558 = vadd.f32 %v487, %v542
    %v559 = vadd.f32 %v488, %v543
    %v560 = vadd.f32 %v489, %v544
    %v561 = vld [vmem:[%s0 + $0x7] sm:$0x1]
    %vm562 = vcmp.gt.s32.totalorder %v62, 7
    %v563 = vsel %vm562, %v561, 4294967295
    %v564 = vlaneseq
    %v565 = vshrl.u32 %v564, 7
    %v566 = vsub.s32 0, %v565
    %v567 = vrot.slane %v563, %v566
    %vm568 = vcmp.eq.s32.totalorder %v37, %v567
    %vm569 = vcmp.eq.s32.totalorder %v38, %v567
    %vm570 = vcmp.eq.s32.totalorder %v39, %v567
    %vm571 = vcmp.eq.s32.totalorder %v40, %v567
    %vm572 = vcmp.eq.s32.totalorder %v41, %v567
    %vm573 = vcmp.eq.s32.totalorder %v42, %v567
    %vm574 = vcmp.eq.s32.totalorder %v43, %v567
    %vm575 = vcmp.eq.s32.totalorder %v44, %v567
    %vm576 = vcmp.eq.s32.totalorder %v45, %v567
    %vm577 = vcmp.eq.s32.totalorder %v46, %v567
    %vm578 = vcmp.eq.s32.totalorder %v47, %v567
    %vm579 = vcmp.eq.s32.totalorder %v48, %v567
    %vm580 = vcmp.eq.s32.totalorder %v49, %v567
    %vm581 = vcmp.eq.s32.totalorder %v50, %v567
    %vm582 = vcmp.eq.s32.totalorder %v51, %v567
    %vm583 = vcmp.eq.s32.totalorder %v52, %v567
    %v584 = vsel %vm568, 1, 0
    %v585 = vsel %vm569, 1, 0
    %v586 = vsel %vm570, 1, 0
    %v587 = vsel %vm571, 1, 0
    %v588 = vsel %vm572, 1, 0
    %v589 = vsel %vm573, 1, 0
    %v590 = vsel %vm574, 1, 0
    %v591 = vsel %vm575, 1, 0
    %v592 = vsel %vm576, 1, 0
    %v593 = vsel %vm577, 1, 0
    %v594 = vsel %vm578, 1, 0
    %v595 = vsel %vm579, 1, 0
    %v596 = vsel %vm580, 1, 0
    %v597 = vsel %vm581, 1, 0
    %v598 = vsel %vm582, 1, 0
    %v599 = vsel %vm583, 1, 0
    %v600 = vcvt.s32.f32 %v584
    %v601 = vcvt.s32.f32 %v585
    %v602 = vcvt.s32.f32 %v586
    %v603 = vcvt.s32.f32 %v587
    %v604 = vcvt.s32.f32 %v588
    %v605 = vcvt.s32.f32 %v589
    %v606 = vcvt.s32.f32 %v590
    %v607 = vcvt.s32.f32 %v591
    %v608 = vcvt.s32.f32 %v592
    %v609 = vcvt.s32.f32 %v593
    %v610 = vcvt.s32.f32 %v594
    %v611 = vcvt.s32.f32 %v595
    %v612 = vcvt.s32.f32 %v596
    %v613 = vcvt.s32.f32 %v597
    %v614 = vcvt.s32.f32 %v598
    %v615 = vcvt.s32.f32 %v599
    %v616 = vadd.f32 %v545, %v600
    %v617 = vadd.f32 %v546, %v601
    %v618 = vadd.f32 %v547, %v602
    %v619 = vadd.f32 %v548, %v603
    %v620 = vadd.f32 %v549, %v604
    %v621 = vadd.f32 %v550, %v605
    %v622 = vadd.f32 %v551, %v606
    %v623 = vadd.f32 %v552, %v607
    %v624 = vadd.f32 %v553, %v608
    %v625 = vadd.f32 %v554, %v609
    %v626 = vadd.f32 %v555, %v610
    %v627 = vadd.f32 %v556, %v611
    %v628 = vadd.f32 %v557, %v612
    %v629 = vadd.f32 %v558, %v613
    %v630 = vadd.f32 %v559, %v614
    %v631 = vadd.f32 %v560, %v615
    %v632 = vld [vmem:[%s1] sm:$0x1]
    %vm633 = vcmp.gt.s32.totalorder %v63, 0
    %v634 = vsel %vm633, %v632, 4294967295
    %v635 = vlaneseq
    %v636 = vshrl.u32 %v635, 7
    %v637 = vsub.s32 0, %v636
    %v638 = vrot.slane %v634, %v637
    %vm639 = vcmp.eq.s32.totalorder %v37, %v638
    %vm640 = vcmp.eq.s32.totalorder %v38, %v638
    %vm641 = vcmp.eq.s32.totalorder %v39, %v638
    %vm642 = vcmp.eq.s32.totalorder %v40, %v638
    %vm643 = vcmp.eq.s32.totalorder %v41, %v638
    %vm644 = vcmp.eq.s32.totalorder %v42, %v638
    %vm645 = vcmp.eq.s32.totalorder %v43, %v638
    %vm646 = vcmp.eq.s32.totalorder %v44, %v638
    %vm647 = vcmp.eq.s32.totalorder %v45, %v638
    %vm648 = vcmp.eq.s32.totalorder %v46, %v638
    %vm649 = vcmp.eq.s32.totalorder %v47, %v638
    %vm650 = vcmp.eq.s32.totalorder %v48, %v638
    %vm651 = vcmp.eq.s32.totalorder %v49, %v638
    %vm652 = vcmp.eq.s32.totalorder %v50, %v638
    %vm653 = vcmp.eq.s32.totalorder %v51, %v638
    %vm654 = vcmp.eq.s32.totalorder %v52, %v638
    %v655 = vsel %vm639, 1, 0
    %v656 = vsel %vm640, 1, 0
    %v657 = vsel %vm641, 1, 0
    %v658 = vsel %vm642, 1, 0
    %v659 = vsel %vm643, 1, 0
    %v660 = vsel %vm644, 1, 0
    %v661 = vsel %vm645, 1, 0
    %v662 = vsel %vm646, 1, 0
    %v663 = vsel %vm647, 1, 0
    %v664 = vsel %vm648, 1, 0
    %v665 = vsel %vm649, 1, 0
    %v666 = vsel %vm650, 1, 0
    %v667 = vsel %vm651, 1, 0
    %v668 = vsel %vm652, 1, 0
    %v669 = vsel %vm653, 1, 0
    %v670 = vsel %vm654, 1, 0
    %v671 = vcvt.s32.f32 %v655
    %v672 = vcvt.s32.f32 %v656
    %v673 = vcvt.s32.f32 %v657
    %v674 = vcvt.s32.f32 %v658
    %v675 = vcvt.s32.f32 %v659
    %v676 = vcvt.s32.f32 %v660
    %v677 = vcvt.s32.f32 %v661
    %v678 = vcvt.s32.f32 %v662
    %v679 = vcvt.s32.f32 %v663
    %v680 = vcvt.s32.f32 %v664
    %v681 = vcvt.s32.f32 %v665
    %v682 = vcvt.s32.f32 %v666
    %v683 = vcvt.s32.f32 %v667
    %v684 = vcvt.s32.f32 %v668
    %v685 = vcvt.s32.f32 %v669
    %v686 = vcvt.s32.f32 %v670
    %v687 = vadd.f32 %v671, 0.0
    %v688 = vadd.f32 %v672, 0.0
    %v689 = vadd.f32 %v673, 0.0
    %v690 = vadd.f32 %v674, 0.0
    %v691 = vadd.f32 %v675, 0.0
    %v692 = vadd.f32 %v676, 0.0
    %v693 = vadd.f32 %v677, 0.0
    %v694 = vadd.f32 %v678, 0.0
    %v695 = vadd.f32 %v679, 0.0
    %v696 = vadd.f32 %v680, 0.0
    %v697 = vadd.f32 %v681, 0.0
    %v698 = vadd.f32 %v682, 0.0
    %v699 = vadd.f32 %v683, 0.0
    %v700 = vadd.f32 %v684, 0.0
    %v701 = vadd.f32 %v685, 0.0
    %v702 = vadd.f32 %v686, 0.0
    %v703 = vld [vmem:[%s1 + $0x1] sm:$0x1]
    %vm704 = vcmp.gt.s32.totalorder %v63, 1
    %v705 = vsel %vm704, %v703, 4294967295
    %v706 = vlaneseq
    %v707 = vshrl.u32 %v706, 7
    %v708 = vsub.s32 0, %v707
    %v709 = vrot.slane %v705, %v708
    %vm710 = vcmp.eq.s32.totalorder %v37, %v709
    %vm711 = vcmp.eq.s32.totalorder %v38, %v709
    %vm712 = vcmp.eq.s32.totalorder %v39, %v709
    %vm713 = vcmp.eq.s32.totalorder %v40, %v709
    %vm714 = vcmp.eq.s32.totalorder %v41, %v709
    %vm715 = vcmp.eq.s32.totalorder %v42, %v709
    %vm716 = vcmp.eq.s32.totalorder %v43, %v709
    %vm717 = vcmp.eq.s32.totalorder %v44, %v709
    %vm718 = vcmp.eq.s32.totalorder %v45, %v709
    %vm719 = vcmp.eq.s32.totalorder %v46, %v709
    %vm720 = vcmp.eq.s32.totalorder %v47, %v709
    %vm721 = vcmp.eq.s32.totalorder %v48, %v709
    %vm722 = vcmp.eq.s32.totalorder %v49, %v709
    %vm723 = vcmp.eq.s32.totalorder %v50, %v709
    %vm724 = vcmp.eq.s32.totalorder %v51, %v709
    %vm725 = vcmp.eq.s32.totalorder %v52, %v709
    %v726 = vsel %vm710, 1, 0
    %v727 = vsel %vm711, 1, 0
    %v728 = vsel %vm712, 1, 0
    %v729 = vsel %vm713, 1, 0
    %v730 = vsel %vm714, 1, 0
    %v731 = vsel %vm715, 1, 0
    %v732 = vsel %vm716, 1, 0
    %v733 = vsel %vm717, 1, 0
    %v734 = vsel %vm718, 1, 0
    %v735 = vsel %vm719, 1, 0
    %v736 = vsel %vm720, 1, 0
    %v737 = vsel %vm721, 1, 0
    %v738 = vsel %vm722, 1, 0
    %v739 = vsel %vm723, 1, 0
    %v740 = vsel %vm724, 1, 0
    %v741 = vsel %vm725, 1, 0
    %v742 = vcvt.s32.f32 %v726
    %v743 = vcvt.s32.f32 %v727
    %v744 = vcvt.s32.f32 %v728
    %v745 = vcvt.s32.f32 %v729
    %v746 = vcvt.s32.f32 %v730
    %v747 = vcvt.s32.f32 %v731
    %v748 = vcvt.s32.f32 %v732
    %v749 = vcvt.s32.f32 %v733
    %v750 = vcvt.s32.f32 %v734
    %v751 = vcvt.s32.f32 %v735
    %v752 = vcvt.s32.f32 %v736
    %v753 = vcvt.s32.f32 %v737
    %v754 = vcvt.s32.f32 %v738
    %v755 = vcvt.s32.f32 %v739
    %v756 = vcvt.s32.f32 %v740
    %v757 = vcvt.s32.f32 %v741
    %v758 = vadd.f32 %v687, %v742
    %v759 = vadd.f32 %v688, %v743
    %v760 = vadd.f32 %v689, %v744
    %v761 = vadd.f32 %v690, %v745
    %v762 = vadd.f32 %v691, %v746
    %v763 = vadd.f32 %v692, %v747
    %v764 = vadd.f32 %v693, %v748
    %v765 = vadd.f32 %v694, %v749
    %v766 = vadd.f32 %v695, %v750
    %v767 = vadd.f32 %v696, %v751
    %v768 = vadd.f32 %v697, %v752
    %v769 = vadd.f32 %v698, %v753
    %v770 = vadd.f32 %v699, %v754
    %v771 = vadd.f32 %v700, %v755
    %v772 = vadd.f32 %v701, %v756
    %v773 = vadd.f32 %v702, %v757
    %v774 = vld [vmem:[%s1 + $0x2] sm:$0x1]
    %vm775 = vcmp.gt.s32.totalorder %v63, 2
    %v776 = vsel %vm775, %v774, 4294967295
    %v777 = vlaneseq
    %v778 = vshrl.u32 %v777, 7
    %v779 = vsub.s32 0, %v778
    %v780 = vrot.slane %v776, %v779
    %vm781 = vcmp.eq.s32.totalorder %v37, %v780
    %vm782 = vcmp.eq.s32.totalorder %v38, %v780
    %vm783 = vcmp.eq.s32.totalorder %v39, %v780
    %vm784 = vcmp.eq.s32.totalorder %v40, %v780
    %vm785 = vcmp.eq.s32.totalorder %v41, %v780
    %vm786 = vcmp.eq.s32.totalorder %v42, %v780
    %vm787 = vcmp.eq.s32.totalorder %v43, %v780
    %vm788 = vcmp.eq.s32.totalorder %v44, %v780
    %vm789 = vcmp.eq.s32.totalorder %v45, %v780
    %vm790 = vcmp.eq.s32.totalorder %v46, %v780
    %vm791 = vcmp.eq.s32.totalorder %v47, %v780
    %vm792 = vcmp.eq.s32.totalorder %v48, %v780
    %vm793 = vcmp.eq.s32.totalorder %v49, %v780
    %vm794 = vcmp.eq.s32.totalorder %v50, %v780
    %vm795 = vcmp.eq.s32.totalorder %v51, %v780
    %vm796 = vcmp.eq.s32.totalorder %v52, %v780
    %v797 = vsel %vm781, 1, 0
    %v798 = vsel %vm782, 1, 0
    %v799 = vsel %vm783, 1, 0
    %v800 = vsel %vm784, 1, 0
    %v801 = vsel %vm785, 1, 0
    %v802 = vsel %vm786, 1, 0
    %v803 = vsel %vm787, 1, 0
    %v804 = vsel %vm788, 1, 0
    %v805 = vsel %vm789, 1, 0
    %v806 = vsel %vm790, 1, 0
    %v807 = vsel %vm791, 1, 0
    %v808 = vsel %vm792, 1, 0
    %v809 = vsel %vm793, 1, 0
    %v810 = vsel %vm794, 1, 0
    %v811 = vsel %vm795, 1, 0
    %v812 = vsel %vm796, 1, 0
    %v813 = vcvt.s32.f32 %v797
    %v814 = vcvt.s32.f32 %v798
    %v815 = vcvt.s32.f32 %v799
    %v816 = vcvt.s32.f32 %v800
    %v817 = vcvt.s32.f32 %v801
    %v818 = vcvt.s32.f32 %v802
    %v819 = vcvt.s32.f32 %v803
    %v820 = vcvt.s32.f32 %v804
    %v821 = vcvt.s32.f32 %v805
    %v822 = vcvt.s32.f32 %v806
    %v823 = vcvt.s32.f32 %v807
    %v824 = vcvt.s32.f32 %v808
    %v825 = vcvt.s32.f32 %v809
    %v826 = vcvt.s32.f32 %v810
    %v827 = vcvt.s32.f32 %v811
    %v828 = vcvt.s32.f32 %v812
    %v829 = vadd.f32 %v758, %v813
    %v830 = vadd.f32 %v759, %v814
    %v831 = vadd.f32 %v760, %v815
    %v832 = vadd.f32 %v761, %v816
    %v833 = vadd.f32 %v762, %v817
    %v834 = vadd.f32 %v763, %v818
    %v835 = vadd.f32 %v764, %v819
    %v836 = vadd.f32 %v765, %v820
    %v837 = vadd.f32 %v766, %v821
    %v838 = vadd.f32 %v767, %v822
    %v839 = vadd.f32 %v768, %v823
    %v840 = vadd.f32 %v769, %v824
    %v841 = vadd.f32 %v770, %v825
    %v842 = vadd.f32 %v771, %v826
    %v843 = vadd.f32 %v772, %v827
    %v844 = vadd.f32 %v773, %v828
    %v845 = vld [vmem:[%s1 + $0x3] sm:$0x1]
    %vm846 = vcmp.gt.s32.totalorder %v63, 3
    %v847 = vsel %vm846, %v845, 4294967295
    %v848 = vlaneseq
    %v849 = vshrl.u32 %v848, 7
    %v850 = vsub.s32 0, %v849
    %v851 = vrot.slane %v847, %v850
    %vm852 = vcmp.eq.s32.totalorder %v37, %v851
    %vm853 = vcmp.eq.s32.totalorder %v38, %v851
    %vm854 = vcmp.eq.s32.totalorder %v39, %v851
    %vm855 = vcmp.eq.s32.totalorder %v40, %v851
    %vm856 = vcmp.eq.s32.totalorder %v41, %v851
    %vm857 = vcmp.eq.s32.totalorder %v42, %v851
    %vm858 = vcmp.eq.s32.totalorder %v43, %v851
    %vm859 = vcmp.eq.s32.totalorder %v44, %v851
    %vm860 = vcmp.eq.s32.totalorder %v45, %v851
    %vm861 = vcmp.eq.s32.totalorder %v46, %v851
    %vm862 = vcmp.eq.s32.totalorder %v47, %v851
    %vm863 = vcmp.eq.s32.totalorder %v48, %v851
    %vm864 = vcmp.eq.s32.totalorder %v49, %v851
    %vm865 = vcmp.eq.s32.totalorder %v50, %v851
    %vm866 = vcmp.eq.s32.totalorder %v51, %v851
    %vm867 = vcmp.eq.s32.totalorder %v52, %v851
    %v868 = vsel %vm852, 1, 0
    %v869 = vsel %vm853, 1, 0
    %v870 = vsel %vm854, 1, 0
    %v871 = vsel %vm855, 1, 0
    %v872 = vsel %vm856, 1, 0
    %v873 = vsel %vm857, 1, 0
    %v874 = vsel %vm858, 1, 0
    %v875 = vsel %vm859, 1, 0
    %v876 = vsel %vm860, 1, 0
    %v877 = vsel %vm861, 1, 0
    %v878 = vsel %vm862, 1, 0
    %v879 = vsel %vm863, 1, 0
    %v880 = vsel %vm864, 1, 0
    %v881 = vsel %vm865, 1, 0
    %v882 = vsel %vm866, 1, 0
    %v883 = vsel %vm867, 1, 0
    %v884 = vcvt.s32.f32 %v868
    %v885 = vcvt.s32.f32 %v869
    %v886 = vcvt.s32.f32 %v870
    %v887 = vcvt.s32.f32 %v871
    %v888 = vcvt.s32.f32 %v872
    %v889 = vcvt.s32.f32 %v873
    %v890 = vcvt.s32.f32 %v874
    %v891 = vcvt.s32.f32 %v875
    %v892 = vcvt.s32.f32 %v876
    %v893 = vcvt.s32.f32 %v877
    %v894 = vcvt.s32.f32 %v878
    %v895 = vcvt.s32.f32 %v879
    %v896 = vcvt.s32.f32 %v880
    %v897 = vcvt.s32.f32 %v881
    %v898 = vcvt.s32.f32 %v882
    %v899 = vcvt.s32.f32 %v883
    %v900 = vadd.f32 %v829, %v884
    %v901 = vadd.f32 %v830, %v885
    %v902 = vadd.f32 %v831, %v886
    %v903 = vadd.f32 %v832, %v887
    %v904 = vadd.f32 %v833, %v888
    %v905 = vadd.f32 %v834, %v889
    %v906 = vadd.f32 %v835, %v890
    %v907 = vadd.f32 %v836, %v891
    %v908 = vadd.f32 %v837, %v892
    %v909 = vadd.f32 %v838, %v893
    %v910 = vadd.f32 %v839, %v894
    %v911 = vadd.f32 %v840, %v895
    %v912 = vadd.f32 %v841, %v896
    %v913 = vadd.f32 %v842, %v897
    %v914 = vadd.f32 %v843, %v898
    %v915 = vadd.f32 %v844, %v899
    %v916 = vld [vmem:[%s1 + $0x4] sm:$0x1]
    %vm917 = vcmp.gt.s32.totalorder %v63, 4
    %v918 = vsel %vm917, %v916, 4294967295
    %v919 = vlaneseq
    %v920 = vshrl.u32 %v919, 7
    %v921 = vsub.s32 0, %v920
    %v922 = vrot.slane %v918, %v921
    %vm923 = vcmp.eq.s32.totalorder %v37, %v922
    %vm924 = vcmp.eq.s32.totalorder %v38, %v922
    %vm925 = vcmp.eq.s32.totalorder %v39, %v922
    %vm926 = vcmp.eq.s32.totalorder %v40, %v922
    %vm927 = vcmp.eq.s32.totalorder %v41, %v922
    %vm928 = vcmp.eq.s32.totalorder %v42, %v922
    %vm929 = vcmp.eq.s32.totalorder %v43, %v922
    %vm930 = vcmp.eq.s32.totalorder %v44, %v922
    %vm931 = vcmp.eq.s32.totalorder %v45, %v922
    %vm932 = vcmp.eq.s32.totalorder %v46, %v922
    %vm933 = vcmp.eq.s32.totalorder %v47, %v922
    %vm934 = vcmp.eq.s32.totalorder %v48, %v922
    %vm935 = vcmp.eq.s32.totalorder %v49, %v922
    %vm936 = vcmp.eq.s32.totalorder %v50, %v922
    %vm937 = vcmp.eq.s32.totalorder %v51, %v922
    %vm938 = vcmp.eq.s32.totalorder %v52, %v922
    %v939 = vsel %vm923, 1, 0
    %v940 = vsel %vm924, 1, 0
    %v941 = vsel %vm925, 1, 0
    %v942 = vsel %vm926, 1, 0
    %v943 = vsel %vm927, 1, 0
    %v944 = vsel %vm928, 1, 0
    %v945 = vsel %vm929, 1, 0
    %v946 = vsel %vm930, 1, 0
    %v947 = vsel %vm931, 1, 0
    %v948 = vsel %vm932, 1, 0
    %v949 = vsel %vm933, 1, 0
    %v950 = vsel %vm934, 1, 0
    %v951 = vsel %vm935, 1, 0
    %v952 = vsel %vm936, 1, 0
    %v953 = vsel %vm937, 1, 0
    %v954 = vsel %vm938, 1, 0
    %v955 = vcvt.s32.f32 %v939
    %v956 = vcvt.s32.f32 %v940
    %v957 = vcvt.s32.f32 %v941
    %v958 = vcvt.s32.f32 %v942
    %v959 = vcvt.s32.f32 %v943
    %v960 = vcvt.s32.f32 %v944
    %v961 = vcvt.s32.f32 %v945
    %v962 = vcvt.s32.f32 %v946
    %v963 = vcvt.s32.f32 %v947
    %v964 = vcvt.s32.f32 %v948
    %v965 = vcvt.s32.f32 %v949
    %v966 = vcvt.s32.f32 %v950
    %v967 = vcvt.s32.f32 %v951
    %v968 = vcvt.s32.f32 %v952
    %v969 = vcvt.s32.f32 %v953
    %v970 = vcvt.s32.f32 %v954
    %v971 = vadd.f32 %v900, %v955
    %v972 = vadd.f32 %v901, %v956
    %v973 = vadd.f32 %v902, %v957
    %v974 = vadd.f32 %v903, %v958
    %v975 = vadd.f32 %v904, %v959
    %v976 = vadd.f32 %v905, %v960
    %v977 = vadd.f32 %v906, %v961
    %v978 = vadd.f32 %v907, %v962
    %v979 = vadd.f32 %v908, %v963
    %v980 = vadd.f32 %v909, %v964
    %v981 = vadd.f32 %v910, %v965
    %v982 = vadd.f32 %v911, %v966
    %v983 = vadd.f32 %v912, %v967
    %v984 = vadd.f32 %v913, %v968
    %v985 = vadd.f32 %v914, %v969
    %v986 = vadd.f32 %v915, %v970
    %v987 = vld [vmem:[%s1 + $0x5] sm:$0x1]
    %vm988 = vcmp.gt.s32.totalorder %v63, 5
    %v989 = vsel %vm988, %v987, 4294967295
    %v990 = vlaneseq
    %v991 = vshrl.u32 %v990, 7
    %v992 = vsub.s32 0, %v991
    %v993 = vrot.slane %v989, %v992
    %vm994 = vcmp.eq.s32.totalorder %v37, %v993
    %vm995 = vcmp.eq.s32.totalorder %v38, %v993
    %vm996 = vcmp.eq.s32.totalorder %v39, %v993
    %vm997 = vcmp.eq.s32.totalorder %v40, %v993
    %vm998 = vcmp.eq.s32.totalorder %v41, %v993
    %vm999 = vcmp.eq.s32.totalorder %v42, %v993
    %vm1000 = vcmp.eq.s32.totalorder %v43, %v993
    %vm1001 = vcmp.eq.s32.totalorder %v44, %v993
    %vm1002 = vcmp.eq.s32.totalorder %v45, %v993
    %vm1003 = vcmp.eq.s32.totalorder %v46, %v993
    %vm1004 = vcmp.eq.s32.totalorder %v47, %v993
    %vm1005 = vcmp.eq.s32.totalorder %v48, %v993
    %vm1006 = vcmp.eq.s32.totalorder %v49, %v993
    %vm1007 = vcmp.eq.s32.totalorder %v50, %v993
    %vm1008 = vcmp.eq.s32.totalorder %v51, %v993
    %vm1009 = vcmp.eq.s32.totalorder %v52, %v993
    %v1010 = vsel %vm994, 1, 0
    %v1011 = vsel %vm995, 1, 0
    %v1012 = vsel %vm996, 1, 0
    %v1013 = vsel %vm997, 1, 0
    %v1014 = vsel %vm998, 1, 0
    %v1015 = vsel %vm999, 1, 0
    %v1016 = vsel %vm1000, 1, 0
    %v1017 = vsel %vm1001, 1, 0
    %v1018 = vsel %vm1002, 1, 0
    %v1019 = vsel %vm1003, 1, 0
    %v1020 = vsel %vm1004, 1, 0
    %v1021 = vsel %vm1005, 1, 0
    %v1022 = vsel %vm1006, 1, 0
    %v1023 = vsel %vm1007, 1, 0
    %v1024 = vsel %vm1008, 1, 0
    %v1025 = vsel %vm1009, 1, 0
    %v1026 = vcvt.s32.f32 %v1010
    %v1027 = vcvt.s32.f32 %v1011
    %v1028 = vcvt.s32.f32 %v1012
    %v1029 = vcvt.s32.f32 %v1013
    %v1030 = vcvt.s32.f32 %v1014
    %v1031 = vcvt.s32.f32 %v1015
    %v1032 = vcvt.s32.f32 %v1016
    %v1033 = vcvt.s32.f32 %v1017
    %v1034 = vcvt.s32.f32 %v1018
    %v1035 = vcvt.s32.f32 %v1019
    %v1036 = vcvt.s32.f32 %v1020
    %v1037 = vcvt.s32.f32 %v1021
    %v1038 = vcvt.s32.f32 %v1022
    %v1039 = vcvt.s32.f32 %v1023
    %v1040 = vcvt.s32.f32 %v1024
    %v1041 = vcvt.s32.f32 %v1025
    %v1042 = vadd.f32 %v971, %v1026
    %v1043 = vadd.f32 %v972, %v1027
    %v1044 = vadd.f32 %v973, %v1028
    %v1045 = vadd.f32 %v974, %v1029
    %v1046 = vadd.f32 %v975, %v1030
    %v1047 = vadd.f32 %v976, %v1031
    %v1048 = vadd.f32 %v977, %v1032
    %v1049 = vadd.f32 %v978, %v1033
    %v1050 = vadd.f32 %v979, %v1034
    %v1051 = vadd.f32 %v980, %v1035
    %v1052 = vadd.f32 %v981, %v1036
    %v1053 = vadd.f32 %v982, %v1037
    %v1054 = vadd.f32 %v983, %v1038
    %v1055 = vadd.f32 %v984, %v1039
    %v1056 = vadd.f32 %v985, %v1040
    %v1057 = vadd.f32 %v986, %v1041
    %v1058 = vld [vmem:[%s1 + $0x6] sm:$0x1]
    %vm1059 = vcmp.gt.s32.totalorder %v63, 6
    %v1060 = vsel %vm1059, %v1058, 4294967295
    %v1061 = vlaneseq
    %v1062 = vshrl.u32 %v1061, 7
    %v1063 = vsub.s32 0, %v1062
    %v1064 = vrot.slane %v1060, %v1063
    %vm1065 = vcmp.eq.s32.totalorder %v37, %v1064
    %vm1066 = vcmp.eq.s32.totalorder %v38, %v1064
    %vm1067 = vcmp.eq.s32.totalorder %v39, %v1064
    %vm1068 = vcmp.eq.s32.totalorder %v40, %v1064
    %vm1069 = vcmp.eq.s32.totalorder %v41, %v1064
    %vm1070 = vcmp.eq.s32.totalorder %v42, %v1064
    %vm1071 = vcmp.eq.s32.totalorder %v43, %v1064
    %vm1072 = vcmp.eq.s32.totalorder %v44, %v1064
    %vm1073 = vcmp.eq.s32.totalorder %v45, %v1064
    %vm1074 = vcmp.eq.s32.totalorder %v46, %v1064
    %vm1075 = vcmp.eq.s32.totalorder %v47, %v1064
    %vm1076 = vcmp.eq.s32.totalorder %v48, %v1064
    %vm1077 = vcmp.eq.s32.totalorder %v49, %v1064
    %vm1078 = vcmp.eq.s32.totalorder %v50, %v1064
    %vm1079 = vcmp.eq.s32.totalorder %v51, %v1064
    %vm1080 = vcmp.eq.s32.totalorder %v52, %v1064
    %v1081 = vsel %vm1065, 1, 0
    %v1082 = vsel %vm1066, 1, 0
    %v1083 = vsel %vm1067, 1, 0
    %v1084 = vsel %vm1068, 1, 0
    %v1085 = vsel %vm1069, 1, 0
    %v1086 = vsel %vm1070, 1, 0
    %v1087 = vsel %vm1071, 1, 0
    %v1088 = vsel %vm1072, 1, 0
    %v1089 = vsel %vm1073, 1, 0
    %v1090 = vsel %vm1074, 1, 0
    %v1091 = vsel %vm1075, 1, 0
    %v1092 = vsel %vm1076, 1, 0
    %v1093 = vsel %vm1077, 1, 0
    %v1094 = vsel %vm1078, 1, 0
    %v1095 = vsel %vm1079, 1, 0
    %v1096 = vsel %vm1080, 1, 0
    %v1097 = vcvt.s32.f32 %v1081
    %v1098 = vcvt.s32.f32 %v1082
    %v1099 = vcvt.s32.f32 %v1083
    %v1100 = vcvt.s32.f32 %v1084
    %v1101 = vcvt.s32.f32 %v1085
    %v1102 = vcvt.s32.f32 %v1086
    %v1103 = vcvt.s32.f32 %v1087
    %v1104 = vcvt.s32.f32 %v1088
    %v1105 = vcvt.s32.f32 %v1089
    %v1106 = vcvt.s32.f32 %v1090
    %v1107 = vcvt.s32.f32 %v1091
    %v1108 = vcvt.s32.f32 %v1092
    %v1109 = vcvt.s32.f32 %v1093
    %v1110 = vcvt.s32.f32 %v1094
    %v1111 = vcvt.s32.f32 %v1095
    %v1112 = vcvt.s32.f32 %v1096
    %v1113 = vadd.f32 %v1042, %v1097
    %v1114 = vadd.f32 %v1043, %v1098
    %v1115 = vadd.f32 %v1044, %v1099
    %v1116 = vadd.f32 %v1045, %v1100
    %v1117 = vadd.f32 %v1046, %v1101
    %v1118 = vadd.f32 %v1047, %v1102
    %v1119 = vadd.f32 %v1048, %v1103
    %v1120 = vadd.f32 %v1049, %v1104
    %v1121 = vadd.f32 %v1050, %v1105
    %v1122 = vadd.f32 %v1051, %v1106
    %v1123 = vadd.f32 %v1052, %v1107
    %v1124 = vadd.f32 %v1053, %v1108
    %v1125 = vadd.f32 %v1054, %v1109
    %v1126 = vadd.f32 %v1055, %v1110
    %v1127 = vadd.f32 %v1056, %v1111
    %v1128 = vadd.f32 %v1057, %v1112
    %v1129 = vld [vmem:[%s1 + $0x7] sm:$0x1]
    %vm1130 = vcmp.gt.s32.totalorder %v63, 7
    %v1131 = vsel %vm1130, %v1129, 4294967295
    %v1132 = vlaneseq
    %v1133 = vshrl.u32 %v1132, 7
    %v1134 = vsub.s32 0, %v1133
    %v1135 = vrot.slane %v1131, %v1134
    %vm1136 = vcmp.eq.s32.totalorder %v37, %v1135
    %vm1137 = vcmp.eq.s32.totalorder %v38, %v1135
    %vm1138 = vcmp.eq.s32.totalorder %v39, %v1135
    %vm1139 = vcmp.eq.s32.totalorder %v40, %v1135
    %vm1140 = vcmp.eq.s32.totalorder %v41, %v1135
    %vm1141 = vcmp.eq.s32.totalorder %v42, %v1135
    %vm1142 = vcmp.eq.s32.totalorder %v43, %v1135
    %vm1143 = vcmp.eq.s32.totalorder %v44, %v1135
    %vm1144 = vcmp.eq.s32.totalorder %v45, %v1135
    %vm1145 = vcmp.eq.s32.totalorder %v46, %v1135
    %vm1146 = vcmp.eq.s32.totalorder %v47, %v1135
    %vm1147 = vcmp.eq.s32.totalorder %v48, %v1135
    %vm1148 = vcmp.eq.s32.totalorder %v49, %v1135
    %vm1149 = vcmp.eq.s32.totalorder %v50, %v1135
    %vm1150 = vcmp.eq.s32.totalorder %v51, %v1135
    %vm1151 = vcmp.eq.s32.totalorder %v52, %v1135
    %v1152 = vsel %vm1136, 1, 0
    %v1153 = vsel %vm1137, 1, 0
    %v1154 = vsel %vm1138, 1, 0
    %v1155 = vsel %vm1139, 1, 0
    %v1156 = vsel %vm1140, 1, 0
    %v1157 = vsel %vm1141, 1, 0
    %v1158 = vsel %vm1142, 1, 0
    %v1159 = vsel %vm1143, 1, 0
    %v1160 = vsel %vm1144, 1, 0
    %v1161 = vsel %vm1145, 1, 0
    %v1162 = vsel %vm1146, 1, 0
    %v1163 = vsel %vm1147, 1, 0
    %v1164 = vsel %vm1148, 1, 0
    %v1165 = vsel %vm1149, 1, 0
    %v1166 = vsel %vm1150, 1, 0
    %v1167 = vsel %vm1151, 1, 0
    %v1168 = vcvt.s32.f32 %v1152
    %v1169 = vcvt.s32.f32 %v1153
    %v1170 = vcvt.s32.f32 %v1154
    %v1171 = vcvt.s32.f32 %v1155
    %v1172 = vcvt.s32.f32 %v1156
    %v1173 = vcvt.s32.f32 %v1157
    %v1174 = vcvt.s32.f32 %v1158
    %v1175 = vcvt.s32.f32 %v1159
    %v1176 = vcvt.s32.f32 %v1160
    %v1177 = vcvt.s32.f32 %v1161
    %v1178 = vcvt.s32.f32 %v1162
    %v1179 = vcvt.s32.f32 %v1163
    %v1180 = vcvt.s32.f32 %v1164
    %v1181 = vcvt.s32.f32 %v1165
    %v1182 = vcvt.s32.f32 %v1166
    %v1183 = vcvt.s32.f32 %v1167
    %v1184 = vadd.f32 %v1113, %v1168
    %v1185 = vadd.f32 %v1114, %v1169
    %v1186 = vadd.f32 %v1115, %v1170
    %v1187 = vadd.f32 %v1116, %v1171
    %v1188 = vadd.f32 %v1117, %v1172
    %v1189 = vadd.f32 %v1118, %v1173
    %v1190 = vadd.f32 %v1119, %v1174
    %v1191 = vadd.f32 %v1120, %v1175
    %v1192 = vadd.f32 %v1121, %v1176
    %v1193 = vadd.f32 %v1122, %v1177
    %v1194 = vadd.f32 %v1123, %v1178
    %v1195 = vadd.f32 %v1124, %v1179
    %v1196 = vadd.f32 %v1125, %v1180
    %v1197 = vadd.f32 %v1126, %v1181
    %v1198 = vadd.f32 %v1127, %v1182
    %v1199 = vadd.f32 %v1128, %v1183
    %v1200 = vpack.c.bf16 %v617, %v616
    %v1201 = vpack.c.bf16 %v1185, %v1184
    %v1202 = vpack.c.bf16 %v619, %v618
    %v1203 = vpack.c.bf16 %v1187, %v1186
    %v1204 = vpack.c.bf16 %v621, %v620
    %v1205 = vpack.c.bf16 %v1189, %v1188
    %v1206 = vpack.c.bf16 %v623, %v622
    %v1207 = vpack.c.bf16 %v1191, %v1190
    %v1208 = vpack.c.bf16 %v625, %v624
    %v1209 = vpack.c.bf16 %v1193, %v1192
    %v1210 = vpack.c.bf16 %v627, %v626
    %v1211 = vpack.c.bf16 %v1195, %v1194
    %v1212 = vpack.c.bf16 %v629, %v628
    %v1213 = vpack.c.bf16 %v1197, %v1196
    %v1214 = vpack.c.bf16 %v631, %v630
    %v1215 = vpack.c.bf16 %v1199, %v1198
    %v1216 = vld [vmem:[%s4] sm:$0xf]
    %v1217 = vld [vmem:[%s4 + $0x4] sm:$0xf]
    %v1218 = vld [vmem:[%s4 + $0x8] sm:$0xf]
    %v1219 = vld [vmem:[%s4 + $0xc] sm:$0xf]
    %v1224 = vunpack.c.l.b16 %v1216
    %v1225 = vunpack.c.l.b16 %v1217
    %v1226 = vunpack.c.l.b16 %v1218
    %v1227 = vunpack.c.l.b16 %v1219
    %v1228 = vpack.c.b16 %v1225, %v1224
    %v1229 = vpack.c.b16 %v1227, %v1226
    %1232 = vmatprep.subr.bf16.mxu0 %v1215
    %1233 = vmatpush1.bf16.msra.mxu0 %v1214
    %1234 = vmatprep.subr.bf16.mxu0 %v1213
    %1235 = vmatpush1.bf16.msra.mxu0 %v1212
    %1236 = vmatprep.subr.bf16.mxu0 %v1211
    %1237 = vmatpush1.bf16.msra.mxu0 %v1210
    %1238 = vmatprep.subr.bf16.mxu0 %v1209
    %1239 = vmatpush1.bf16.msra.mxu0 %v1208
    %1240 = vmatprep.subr.bf16.mxu0 %v1207
    %1241 = vmatpush1.bf16.msra.mxu0 %v1206
    %1242 = vmatprep.subr.bf16.mxu0 %v1205
    %1243 = vmatpush1.bf16.msra.mxu0 %v1204
    %1244 = vmatprep.subr.bf16.mxu0 %v1203
    %1245 = vmatpush1.bf16.msra.mxu0 %v1202
    %1246 = vmatprep.subr.bf16.mxu0 %v1201
    %1247 = vmatpush1.bf16.msra.mxu0 %v1200
    %1248 = vmatprep.subr.bf16.mxu0 0
    %1249 = vmatpush2.bf16.msra.mxu0 0
    %1250 = vmatprep.subr.bf16.mxu0 0
    %1251 = vmatpush2.bf16.msra.mxu0 0
    %1252 = vmatprep.subr.bf16.mxu0 0
    %1253 = vmatpush2.bf16.msra.mxu0 0
    %1254 = vmatprep.subr.bf16.mxu0 0
    %1255 = vmatpush2.bf16.msra.mxu0 0
    %1256 = vmatprep.subr.bf16.mxu0 0
    %1257 = vmatpush2.bf16.msra.mxu0 0
    %1258 = vmatprep.subr.bf16.mxu0 0
    %1259 = vmatpush2.bf16.msra.mxu0 0
    %1260 = vmatprep.subr.bf16.mxu0 0
    %1261 = vmatpush2.bf16.msra.mxu0 0
    %1262 = vmatprep.subr.bf16.mxu0 0
    %1263 = vmatpush2.bf16.msra.mxu0 0
    %1264 = vmatprep.mubr.bf16.mxu0 0
    %1265 = vmatmul.mubr.bf16.gmra.mxu0 %v1228
    %v1266 = vpop.f32.mrf.mxu0
    %v1267 = vadd.f32 0.0, %v1266
    %v1268 = vpop.f32.mrf.mxu0
    %v1269 = vadd.f32 0.0, %v1268
    %v1270 = vpop.f32.mrf.mxu0
    %v1271 = vadd.f32 0.0, %v1270
    %v1272 = vpop.f32.mrf.mxu0
    %v1273 = vadd.f32 0.0, %v1272
    %1274 = vmatprep.mubr.bf16.mxu0 0
    %1275 = vmatmul.mubr.bf16.gmra.mxu0 %v1229
    %v1276 = vpop.f32.mrf.mxu0
    %v1277 = vadd.f32 0.0, %v1276
    %v1278 = vpop.f32.mrf.mxu0
    %v1279 = vadd.f32 0.0, %v1278
    %v1280 = vpop.f32.mrf.mxu0
    %v1281 = vadd.f32 0.0, %v1280
    %v1282 = vpop.f32.mrf.mxu0
    %v1283 = vadd.f32 0.0, %v1282
    %1284 = vdwg.mxu0
    %v1285 = vcvt.s32.f32 %v62
    %v1286 = vrcp.pop %v1285
    %v1287 = vmul.f32 1.0, %v1286
    %v1289 = vlaneseq
    %v1290 = vshrl.u32 %v1289, 7
    %v1291 = vsub.s32 0, %v1290
    %v1292 = vrot.slane %v1287, %v1291
    %v1294 = vmul.f32 %v1267, %v1292
    %v1295 = vmul.f32 %v1271, %v1292
    %v1296 = vmul.f32 %v1277, %v1292
    %v1297 = vmul.f32 %v1281, %v1292
    %v1298 = vcvt.s32.f32 %v63
    %v1299 = vrcp.pop %v1298
    %v1300 = vmul.f32 1.0, %v1299
    %v1302 = vlaneseq
    %v1303 = vshrl.u32 %v1302, 7
    %v1304 = vsub.s32 0, %v1303
    %v1305 = vrot.slane %v1300, %v1304
    %v1307 = vmul.f32 %v1269, %v1305
    %v1308 = vmul.f32 %v1273, %v1305
    %v1309 = vmul.f32 %v1279, %v1305
    %v1310 = vmul.f32 %v1283, %v1305
    %v1311 = vld [vmem:[%s5] sm:$0xff]
    %v1312 = vld [vmem:[%s5 + $0x8] sm:$0xff]
    %v1313 = vld [vmem:[%s5 + $0x10] sm:$0xff]
    %v1314 = vld [vmem:[%s5 + $0x18] sm:$0xff]
    %1316 = vset.pattern.permute.xlu0 0
    %1317 = vperm.xlu0 %1316, %v53
    %v1318 = vpop.permute.xlu0 %1317
    %1321 = vset.pattern.permute.xlu0 0
    %1322 = vperm.xlu0 %1321, %v54
    %v1323 = vpop.permute.xlu0 %1322
    %1326 = vset.pattern.permute.xlu0 0
    %1327 = vperm.xlu0 %1326, %v55
    %v1328 = vpop.permute.xlu0 %1327
    %1331 = vset.pattern.permute.xlu0 0
    %1332 = vperm.xlu0 %1331, %v56
    %v1333 = vpop.permute.xlu0 %1332
    %vm1335 = vcmask 523264
    %v1337 = vsel %vm1335, %v1311, 0
    %v1340 = vsel %vm1335, %v1312, 0
    %v1343 = vsel %vm1335, %v1313, 0
    %v1346 = vsel %vm1335, %v1314, 0
    %1348 = vmatprep.subr.mxu0 0.0
    %1349 = vmatpush1.msra.mxu0 0.0
    %1350 = vmatprep.subr.mxu0 0.0
    %1351 = vmatpush1.msra.mxu0 0.0
    %1352 = vmatprep.subr.mxu0 0.0
    %1353 = vmatpush1.msra.mxu0 0.0
    %1354 = vmatprep.subr.mxu0 0.0
    %1355 = vmatpush1.msra.mxu0 0.0
    %1356 = vmatprep.subr.mxu0 0.0
    %1357 = vmatpush1.msra.mxu0 0.0
    %1358 = vmatprep.subr.mxu0 0.0
    %1359 = vmatpush1.msra.mxu0 0.0
    %1360 = vmatprep.subr.mxu0 0.0
    %1361 = vmatpush1.msra.mxu0 0.0
    %1362 = vmatprep.subr.mxu0 0.0
    %1363 = vmatpush1.msra.mxu0 0.0
    %1364 = vmatprep.subr.mxu0 0.0
    %1365 = vmatpush1.msra.mxu0 %v1310
    %1366 = vmatprep.subr.mxu0 0.0
    %1367 = vmatpush1.msra.mxu0 %v1309
    %1368 = vmatprep.subr.mxu0 0.0
    %1369 = vmatpush1.msra.mxu0 %v1308
    %1370 = vmatprep.subr.mxu0 0.0
    %1371 = vmatpush1.msra.mxu0 %v1307
    %1372 = vmatprep.subr.mxu0 0.0
    %1373 = vmatpush1.msra.mxu0 %v1297
    %1374 = vmatprep.subr.mxu0 0.0
    %1375 = vmatpush1.msra.mxu0 %v1296
    %1376 = vmatprep.subr.mxu0 0.0
    %1377 = vmatpush1.msra.mxu0 %v1295
    %1378 = vmatprep.subr.mxu0 0.0
    %1379 = vmatpush1.msra.mxu0 %v1294
    %1380 = vmatprep.subr.mxu0 0.0
    %1381 = vmatpush2.msra.mxu0 0.0
    %1382 = vmatprep.subr.mxu0 0.0
    %1383 = vmatpush2.msra.mxu0 0.0
    %1384 = vmatprep.subr.mxu0 0.0
    %1385 = vmatpush2.msra.mxu0 0.0
    %1386 = vmatprep.subr.mxu0 0.0
    %1387 = vmatpush2.msra.mxu0 0.0
    %1388 = vmatprep.subr.mxu0 0.0
    %1389 = vmatpush2.msra.mxu0 0.0
    %1390 = vmatprep.subr.mxu0 0.0
    %1391 = vmatpush2.msra.mxu0 0.0
    %1392 = vmatprep.subr.mxu0 0.0
    %1393 = vmatpush2.msra.mxu0 0.0
    %1394 = vmatprep.subr.mxu0 0.0
    %1395 = vmatpush2.msra.mxu0 0.0
    %1396 = vmatprep.subr.mxu0 0.0
    %1397 = vmatpush2.msra.mxu0 0.0
    %1398 = vmatprep.subr.mxu0 0.0
    %1399 = vmatpush2.msra.mxu0 0.0
    %1400 = vmatprep.subr.mxu0 0.0
    %1401 = vmatpush2.msra.mxu0 0.0
    %1402 = vmatprep.subr.mxu0 0.0
    %1403 = vmatpush2.msra.mxu0 0.0
    %1404 = vmatprep.subr.mxu0 0.0
    %1405 = vmatpush2.msra.mxu0 0.0
    %1406 = vmatprep.subr.mxu0 0.0
    %1407 = vmatpush2.msra.mxu0 0.0
    %1408 = vmatprep.subr.mxu0 0.0
    %1409 = vmatpush2.msra.mxu0 0.0
    %1410 = vmatprep.subr.mxu0 0.0
    %1411 = vmatpush2.msra.mxu0 0.0
    %1412 = vmatprep.mubr.f32.mxu0 0.0
    %1413 = vmatmul.mubr.f32.gmra.mxu0 %v1337
    %v1414 = vpop.f32.mrf.mxu0
    %v1415 = vadd.f32 %v1318, %v1414
    %v1416 = vpop.f32.mrf.mxu0
    %1417 = vmatprep.mubr.f32.mxu0 0.0
    %1418 = vmatmul.mubr.f32.gmra.mxu0 %v1340
    %v1419 = vpop.f32.mrf.mxu0
    %v1420 = vadd.f32 %v1323, %v1419
    %v1421 = vpop.f32.mrf.mxu0
    %1422 = vmatprep.mubr.f32.mxu0 0.0
    %1423 = vmatmul.mubr.f32.gmra.mxu0 %v1343
    %v1424 = vpop.f32.mrf.mxu0
    %v1425 = vadd.f32 %v1328, %v1424
    %v1426 = vpop.f32.mrf.mxu0
    %1427 = vmatprep.mubr.f32.mxu0 0.0
    %1428 = vmatmul.mubr.f32.gmra.mxu0 %v1346
    %v1429 = vpop.f32.mrf.mxu0
    %v1430 = vadd.f32 %v1333, %v1429
    %v1431 = vpop.f32.mrf.mxu0
    %1432 = vdwg.mxu0
    %v1433 = vmax.f32 %v1415, 0.0
    %v1434 = vmax.f32 %v1420, 0.0
    %v1435 = vmax.f32 %v1425, 0.0
    %v1436 = vmax.f32 %v1430, 0.0
    %1438 = vset.pattern.permute.xlu0 0
    %1439 = vperm.xlu0 %1438, %v57
    %v1440 = vpop.permute.xlu0 %1439
    %1443 = vset.pattern.permute.xlu0 0
    %1444 = vperm.xlu0 %1443, %v58
    %v1445 = vpop.permute.xlu0 %1444
    %1448 = vset.pattern.permute.xlu0 0
    %1449 = vperm.xlu0 %1448, %v59
    %v1450 = vpop.permute.xlu0 %1449
    %1453 = vset.pattern.permute.xlu0 0
    %1454 = vperm.xlu0 %1453, %v60
    %v1455 = vpop.permute.xlu0 %1454
    %v1457 = vmul.f32 %v1433, %v1440
    %v1458 = vmul.f32 %v1434, %v1445
    %v1459 = vmul.f32 %v1435, %v1450
    %v1460 = vmul.f32 %v1436, %v1455
    %v1461 = vadd.f32 %v1457, %v1458
    %v1462 = vadd.f32 %v1461, %v1459
    %v1463 = vadd.f32 %v1462, %v1460
    %v1464 = vrot.slane %v1463, 4
    %v1465 = vadd.f32 %v1463, %v1464
    %v1466 = vrot.slane %v1465, 2
    %v1467 = vadd.f32 %v1465, %v1466
    %v1468 = vrot.slane %v1467, 1
    %v1469 = vadd.f32 %v1467, %v1468
    %1471 = vset.pattern.permute.xlu0 0
    %1472 = vperm.xlu0 %1471, %v61
    %v1473 = vpop.permute.xlu0 %1472
    %v1475 = vlaneseq
    %v1476 = vshrl.u32 %v1475, 7
    %v1477 = vsub.s32 0, %v1476
    %v1478 = vrot.slane %v1473, %v1477
    %v1479 = vadd.f32 %v1469, %v1478
    %v1480 = vtanh.pop %v1479
    %1481 = vst [vmem:[#allocation3] sm:$0x1] %v1480
    // Predicated region
    $region38: #{tpu_custom_call.1} parent=1 // pred_check
      _
    $region39: #{tpu_custom_call.1} parent=1 // pred_check_branch
      %1483 = sbr.rel (0) target = $region41
    $region40: #{tpu_custom_call.1} parent=1 // pred_region
      %s1485 = ssub.s32 16, 16
      %1486 = vsyncadd [#allocation4], %s1485
      %s1488 = sshll.u32 [#allocation3], 4
      %s1489 = int_to_ptr.vmem [resolvable:$true] %s1488
      %1491 = dma.vmem_to_hbm [thread:$0]  %s1489, 16, %s9, [#allocation4]
    $region41: #{tpu_custom_call.1} parent=1 // pred_fallthru
      _
    // Predicated region
    $region42: #{tpu_custom_call.1} parent=1 // pred_check
      _
    $region43: #{tpu_custom_call.1} parent=1 // pred_check_branch
      %1493 = sbr.rel (0) target = $region45
    $region44: #{tpu_custom_call.1} parent=1 // pred_region
      %1494 = dma.done [#allocation4], 16
    $region45: #{tpu_custom_call.1} parent=1 // pred_fallthru
      _
    %1495 = vsyncpa [#allocation4], 1

</llo_original>
